<compile_context>
chip_gen: v7x
topology: tpu7x:2x2x1
jax: 0.10.0
libtpu: 0.0.40
codegen_flags: <defaults>
</compile_context>

<pallas_src>
import math
import functools

import jax
import jax.numpy as jnp
from jax import lax
from jax.experimental import pallas as pl
from jax.experimental.pallas import tpu as pltpu


def _layer_norm(y, gamma, beta, eps=1e-5):
    mu = jnp.mean(y, axis=-1, keepdims=True)
    var = jnp.mean((y - mu) ** 2, axis=-1, keepdims=True)
    return (y - mu) * lax.rsqrt(var + eps) * gamma + beta


def encoder_layer_kernel(
    # inputs
    x_full_ref, x_q_ref,
    wq_ref, bq_ref, wk_ref, bk_ref, wv_ref, bv_ref,
    wo_ref, bo_ref, ln1_g_ref, ln1_b_ref,
    wc1_ref, bc1_ref, wc2_ref, bc2_ref, ln2_g_ref, ln2_b_ref,
    # outputs
    out_ref, attn_ref,
    # scratch
    k_sc, v_sc,
    *, n_heads, d_k, d_v,
):
    f32 = jnp.float32
    bf16 = jnp.bfloat16

    # ---- K/V for the whole sequence: computed once per batch element (t == 0),
    #      cached head-major (H, S, d) in bf16 VMEM scratch, reused by all q tiles.
    #      K is computed and stored before V is computed (lower f32 temp peak). ----
    @pl.when(pl.program_id(1) == 0)
    def _():
        xf = x_full_ref[0]                                                # (S, d_model) bf16
        k = jnp.dot(xf, wk_ref[...], preferred_element_type=f32) + bk_ref[...]
        for h in range(n_heads):
            k_sc[h] = k[:, h * d_k:(h + 1) * d_k].astype(bf16)
        v = jnp.dot(xf, wv_ref[...], preferred_element_type=f32) + bv_ref[...]
        for h in range(n_heads):
            v_sc[h] = v[:, h * d_v:(h + 1) * d_v].astype(bf16)

    # ---- Q projection for this query tile; scale folded into q. ----
    x_res = x_q_ref[0]                                                    # (TQ, d_model) f32
    q = jnp.dot(x_res.astype(bf16), wq_ref[...],
                preferred_element_type=f32) + bq_ref[...]                 # (TQ, H*d_k)
    q = q * (1.0 / math.sqrt(d_k))

    # ---- per-head scaled-dot-product attention; bf16 prob stores; ctx lane-concat. ----
    ctx_parts = []
    for h in range(n_heads):
        q_h = q[:, h * d_k:(h + 1) * d_k].astype(bf16)                    # (TQ, d_k)
        s_h = lax.dot_general(q_h, k_sc[h], (((1,), (1,)), ((), ())),
                              preferred_element_type=f32)                 # (TQ, S), NT matmul
        s_h = s_h - jnp.max(s_h, axis=-1, keepdims=True)
        e_h = jnp.exp(s_h)
        p_h = e_h * pl.reciprocal(jnp.sum(e_h, axis=-1, keepdims=True), approx=True)
        attn_ref[0, h, :, :] = p_h.astype(bf16)                           # contiguous slab
        ctx_parts.append(jnp.dot(p_h.astype(bf16), v_sc[h],
                                 preferred_element_type=f32))             # (TQ, d_v), K = S

    # ---- head-folded output projection: single matmul with K = H*d_v. ----
    ctx_flat = jnp.concatenate(ctx_parts, axis=-1).astype(bf16)           # (TQ, H*d_v)
    attn_out = jnp.dot(ctx_flat, wo_ref[...],
                       preferred_element_type=f32) + bo_ref[...]          # (TQ, d_model)

    y = _layer_norm(attn_out + x_res, ln1_g_ref[...], ln1_b_ref[...])

    # ---- position-wise FFN (Conv1d k=1 == per-position matmul). ----
    h1 = jnp.maximum(
        jnp.dot(y.astype(bf16), wc1_ref[...], preferred_element_type=f32) + bc1_ref[...],
        0.0)
    h2 = jnp.dot(h1.astype(bf16), wc2_ref[...], preferred_element_type=f32) + bc2_ref[...]
    out_ref[0] = _layer_norm(h2 + y, ln2_g_ref[...], ln2_b_ref[...])


def _prep_params(p):
    """bf16 weights for the MXU matmuls; biases / LN params stay f32."""
    bf16 = jnp.bfloat16
    return {
        "wq": p["wq"].astype(bf16), "bq": p["bq"],
        "wk": p["wk"].astype(bf16), "bk": p["bk"],
        "wv": p["wv"].astype(bf16), "bv": p["bv"],
        "wo": p["wo"].astype(bf16), "bo": p["bo"],
        "ln1_g": p["ln1_g"], "ln1_b": p["ln1_b"],
        "wc1": p["wc1"].astype(bf16), "bc1": p["bc1"],
        "wc2": p["wc2"].astype(bf16), "bc2": p["bc2"],
        "ln2_g": p["ln2_g"], "ln2_b": p["ln2_b"],
    }


def encoder_layer(x, params, *, n_heads, d_k, d_v, q_tile=None,
                  vmem_limit_bytes=64 * 1024 * 1024):
    B, S, d_model = x.shape
    d_ff = params["wc1"].shape[1]
    p = _prep_params(params)

    if q_tile is None:
        # v5e/v6e: 256 fills the MXU M dim and amortizes per-step overhead.
        # v7x (64 MiB VMEM): prefer q_tile=128 for realistic S.
        q_tile = S if S <= 256 else (256 if S % 256 == 0 else S)
    assert S % q_tile == 0
    # attn output is bf16 -> its second-minor block dim must be a multiple of 16
    # (or the full extent).
    assert q_tile == S or q_tile % 16 == 0
    n_q_tiles = S // q_tile

    def const_spec(shape):
        """Constant-index weight/bias block: single-buffered (never changes)."""
        idx = (0,) * len(shape)
        return pl.BlockSpec(shape, lambda b, t, _i=idx: _i,
                            pipeline_mode=pl.Buffered(1))

    in_specs = [
        pl.BlockSpec((1, S, d_model), lambda b, t: (b, 0, 0)),        # x full seq (bf16, K/V)
        pl.BlockSpec((1, q_tile, d_model), lambda b, t: (b, t, 0)),   # x query tile / residual
        const_spec((d_model, n_heads * d_k)), const_spec((1, n_heads * d_k)),   # W_Q, b_Q
        const_spec((d_model, n_heads * d_k)), const_spec((1, n_heads * d_k)),   # W_K, b_K
        const_spec((d_model, n_heads * d_v)), const_spec((1, n_heads * d_v)),   # W_V, b_V
        const_spec((n_heads * d_v, d_model)), const_spec((1, d_model)),         # W_out, b_out
        const_spec((1, d_model)), const_spec((1, d_model)),                     # ln1 g / b
        const_spec((d_model, d_ff)), const_spec((1, d_ff)),                     # conv1 (matmul)
        const_spec((d_ff, d_model)), const_spec((1, d_model)),                  # conv2 (matmul)
        const_spec((1, d_model)), const_spec((1, d_model)),                     # ln2 g / b
    ]
    out_specs = (
        pl.BlockSpec((1, q_tile, d_model), lambda b, t: (b, t, 0)),
        pl.BlockSpec((1, n_heads, q_tile, S), lambda b, t: (b, 0, t, 0)),
    )
    out_shape = (
        jax.ShapeDtypeStruct((B, S, d_model), jnp.float32),
        jax.ShapeDtypeStruct((B, n_heads, S, S), jnp.bfloat16),   # bf16 probs (perf review)
    )
    scratch_shapes = [
        pltpu.VMEM((n_heads, S, d_k), jnp.bfloat16),   # K heads (whole seq, cached)
        pltpu.VMEM((n_heads, S, d_v), jnp.bfloat16),   # V heads (whole seq, cached)
    ]

    kernel = functools.partial(encoder_layer_kernel, n_heads=n_heads, d_k=d_k, d_v=d_v)

    return pl.pallas_call(
        kernel,
        out_shape=out_shape,
        grid=(B, n_q_tiles),
        in_specs=in_specs,
        out_specs=out_specs,
        scratch_shapes=scratch_shapes,
        compiler_params=pltpu.CompilerParams(
            dimension_semantics=("parallel", "arbitrary"),
            vmem_limit_bytes=vmem_limit_bytes),
    )(
        x.astype(jnp.bfloat16), x,
        p["wq"], p["bq"], p["wk"], p["bk"], p["wv"], p["bv"],
        p["wo"], p["bo"], p["ln1_g"], p["ln1_b"],
        p["wc1"], p["bc1"], p["wc2"], p["bc2"], p["ln2_g"], p["ln2_b"],
    )


def encoder_layer_ref(x, params, *, n_heads, d_k, d_v):
    """Pure-JAX reference mirroring the PyTorch forward with the same
    bf16-matmul / f32-accumulate precision policy as the kernel."""
    B, S, d_model = x.shape
    p = _prep_params(params)
    f32 = jnp.float32
    bf = lambda a: a.astype(jnp.bfloat16)

    q = jnp.einsum("bsd,dh->bsh", bf(x), p["wq"], preferred_element_type=f32) + p["bq"]
    k = jnp.einsum("bsd,dh->bsh", bf(x), p["wk"], preferred_element_type=f32) + p["bk"]
    v = jnp.einsum("bsd,dh->bsh", bf(x), p["wv"], preferred_element_type=f32) + p["bv"]
    q = q.reshape(B, S, n_heads, d_k).transpose(0, 2, 1, 3)
    k = k.reshape(B, S, n_heads, d_k).transpose(0, 2, 1, 3)
    v = v.reshape(B, S, n_heads, d_v).transpose(0, 2, 1, 3)

    scores = jnp.einsum("bhqd,bhkd->bhqk", bf(q), bf(k),
                        preferred_element_type=f32) / math.sqrt(d_k)
    attn = jax.nn.softmax(scores, axis=-1)
    ctx = jnp.einsum("bhqk,bhkd->bhqd", bf(attn), bf(v), preferred_element_type=f32)
    ctx = ctx.transpose(0, 2, 1, 3).reshape(B, S, n_heads * d_v)
    out = jnp.einsum("bqv,vd->bqd", bf(ctx), p["wo"],
                     preferred_element_type=f32) + p["bo"]

    def ln(y, g, b):
        mu = jnp.mean(y, -1, keepdims=True)
        var = jnp.mean((y - mu) ** 2, -1, keepdims=True)
        return (y - mu) / jnp.sqrt(var + 1e-5) * g + b

    y = ln(out + x, p["ln1_g"], p["ln1_b"])
    h1 = jax.nn.relu(jnp.einsum("bqd,df->bqf", bf(y), p["wc1"],
                                preferred_element_type=f32) + p["bc1"])
    h2 = jnp.einsum("bqf,fd->bqd", bf(h1), p["wc2"],
                    preferred_element_type=f32) + p["bc2"]
    return ln(h2 + y, p["ln2_g"], p["ln2_b"]), attn


def make_params(key, d_model, d_k, d_v, d_ff, n_heads):
    ks = jax.random.split(key, 10)
    s = lambda fan_in: 1.0 / math.sqrt(fan_in)
    return {
        "wq": jax.random.normal(ks[0], (d_model, n_heads * d_k), jnp.float32) * s(d_model),
        "bq": jax.random.normal(ks[1], (1, n_heads * d_k), jnp.float32) * 0.02,
        "wk": jax.random.normal(ks[2], (d_model, n_heads * d_k), jnp.float32) * s(d_model),
        "bk": jnp.zeros((1, n_heads * d_k), jnp.float32),
        "wv": jax.random.normal(ks[3], (d_model, n_heads * d_v), jnp.float32) * s(d_model),
        "bv": jnp.zeros((1, n_heads * d_v), jnp.float32),
        "wo": jax.random.normal(ks[4], (n_heads * d_v, d_model), jnp.float32) * s(n_heads * d_v),
        "bo": jax.random.normal(ks[5], (1, d_model), jnp.float32) * 0.02,
        "ln1_g": jnp.ones((1, d_model), jnp.float32),
        "ln1_b": jnp.zeros((1, d_model), jnp.float32),
        # Conv1d(k=1) weights stored transposed: (in_channels, out_channels)
        "wc1": jax.random.normal(ks[6], (d_model, d_ff), jnp.float32) * s(d_model),
        "bc1": jax.random.normal(ks[7], (1, d_ff), jnp.float32) * 0.02,
        "wc2": jax.random.normal(ks[8], (d_ff, d_model), jnp.float32) * s(d_ff),
        "bc2": jax.random.normal(ks[9], (1, d_model), jnp.float32) * 0.02,
        "ln2_g": jnp.ones((1, d_model), jnp.float32),
        "ln2_b": jnp.zeros((1, d_model), jnp.float32),
    }


if __name__ == "__main__":
    B, S = 2, 32
    d_model, d_k, d_v, d_ff, n_heads = 32, 16, 16, 64, 4

    key = jax.random.PRNGKey(0)
    kx, kp = jax.random.split(key)
    x = jax.random.normal(kx, (B, S, d_model), jnp.float32)
    params = make_params(kp, d_model, d_k, d_v, d_ff, n_heads)

    # q_tile=16 -> two query tiles per batch element (exercises the K/V caching path;
    # 16 is the bf16 sublane quantum required by the bf16 attention-prob output block).
    out, attn = encoder_layer(x, params, n_heads=n_heads, d_k=d_k, d_v=d_v, q_tile=16)
    out = jax.block_until_ready(out)
    attn = jax.block_until_ready(attn)

    out_ref, attn_ref = encoder_layer_ref(x, params, n_heads=n_heads, d_k=d_k, d_v=d_v)
    assert out.shape == (B, S, d_model) and out.dtype == jnp.float32
    assert attn.shape == (B, n_heads, S, S) and attn.dtype == jnp.bfloat16
    # bf16 matmuls, bf16 stored probs and approx reciprocal (probs only approximately
    # sum to 1) -> modest tolerances; ref mirrors the matmul precision policy.
    assert jnp.allclose(out, out_ref, atol=2e-2, rtol=2e-2), \
        float(jnp.max(jnp.abs(out - out_ref)))
    assert jnp.allclose(attn.astype(jnp.float32), attn_ref, atol=2e-2, rtol=2e-2), \
        float(jnp.max(jnp.abs(attn.astype(jnp.float32) - attn_ref)))

    print("KERNEL_OK")
</pallas_src>

<mosaic_0001>
module attributes {stable_mosaic.version = 11 : i64} {
  func.func @encoder_layer_kernel(%arg0: i32, %arg1: i32, %arg2: memref<1x32x32xbf16, #tpu.memory_space<vmem>>, %arg3: memref<1x16x32xf32, #tpu.memory_space<vmem>>, %arg4: memref<32x64xbf16, #tpu.memory_space<vmem>>, %arg5: memref<1x64xf32, #tpu.memory_space<vmem>>, %arg6: memref<32x64xbf16, #tpu.memory_space<vmem>>, %arg7: memref<1x64xf32, #tpu.memory_space<vmem>>, %arg8: memref<32x64xbf16, #tpu.memory_space<vmem>>, %arg9: memref<1x64xf32, #tpu.memory_space<vmem>>, %arg10: memref<64x32xbf16, #tpu.memory_space<vmem>>, %arg11: memref<1x32xf32, #tpu.memory_space<vmem>>, %arg12: memref<1x32xf32, #tpu.memory_space<vmem>>, %arg13: memref<1x32xf32, #tpu.memory_space<vmem>>, %arg14: memref<32x64xbf16, #tpu.memory_space<vmem>>, %arg15: memref<1x64xf32, #tpu.memory_space<vmem>>, %arg16: memref<64x32xbf16, #tpu.memory_space<vmem>>, %arg17: memref<1x32xf32, #tpu.memory_space<vmem>>, %arg18: memref<1x32xf32, #tpu.memory_space<vmem>>, %arg19: memref<1x32xf32, #tpu.memory_space<vmem>>, %arg20: memref<1x16x32xf32, #tpu.memory_space<vmem>>, %arg21: memref<1x4x16x32xbf16, #tpu.memory_space<vmem>>, %arg22: memref<4x32x16xbf16, #tpu.memory_space<vmem>>, %arg23: memref<4x32x16xbf16, #tpu.memory_space<vmem>>) attributes {dimension_semantics = [#tpu.dimension_semantics<parallel>, #tpu.dimension_semantics<arbitrary>], iteration_bounds = array<i64: 2, 2>, scalar_prefetch = 0 : i64, scratch_operands = 2 : i64, tpu.core_type = #tpu.core_type<tc>, window_params = [{transform_indices = @transform_0, window_bounds = array<i64: 1, 32, 32>}, {transform_indices = @transform_1, window_bounds = array<i64: 1, 16, 32>}, {pipeline_mode = #tpu.pipeline_mode<synchronous>, transform_indices = @transform_2, window_bounds = array<i64: 32, 64>}, {pipeline_mode = #tpu.pipeline_mode<synchronous>, transform_indices = @transform_3, window_bounds = array<i64: 1, 64>}, {pipeline_mode = #tpu.pipeline_mode<synchronous>, transform_indices = @transform_4, window_bounds = array<i64: 32, 64>}, {pipeline_mode = #tpu.pipeline_mode<synchronous>, transform_indices = @transform_5, window_bounds = array<i64: 1, 64>}, {pipeline_mode = #tpu.pipeline_mode<synchronous>, transform_indices = @transform_6, window_bounds = array<i64: 32, 64>}, {pipeline_mode = #tpu.pipeline_mode<synchronous>, transform_indices = @transform_7, window_bounds = array<i64: 1, 64>}, {pipeline_mode = #tpu.pipeline_mode<synchronous>, transform_indices = @transform_8, window_bounds = array<i64: 64, 32>}, {pipeline_mode = #tpu.pipeline_mode<synchronous>, transform_indices = @transform_9, window_bounds = array<i64: 1, 32>}, {pipeline_mode = #tpu.pipeline_mode<synchronous>, transform_indices = @transform_10, window_bounds = array<i64: 1, 32>}, {pipeline_mode = #tpu.pipeline_mode<synchronous>, transform_indices = @transform_11, window_bounds = array<i64: 1, 32>}, {pipeline_mode = #tpu.pipeline_mode<synchronous>, transform_indices = @transform_12, window_bounds = array<i64: 32, 64>}, {pipeline_mode = #tpu.pipeline_mode<synchronous>, transform_indices = @transform_13, window_bounds = array<i64: 1, 64>}, {pipeline_mode = #tpu.pipeline_mode<synchronous>, transform_indices = @transform_14, window_bounds = array<i64: 64, 32>}, {pipeline_mode = #tpu.pipeline_mode<synchronous>, transform_indices = @transform_15, window_bounds = array<i64: 1, 32>}, {pipeline_mode = #tpu.pipeline_mode<synchronous>, transform_indices = @transform_16, window_bounds = array<i64: 1, 32>}, {pipeline_mode = #tpu.pipeline_mode<synchronous>, transform_indices = @transform_17, window_bounds = array<i64: 1, 32>}, {transform_indices = @transform_18, window_bounds = array<i64: 1, 16, 32>}, {transform_indices = @transform_19, window_bounds = array<i64: 1, 4, 16, 32>}]} {
    %c0_i32 = arith.constant 0 : i32
    %0 = arith.cmpi eq, %arg1, %c0_i32 : i32
    %1 = arith.extui %0 : i1 to i32
    %c0_i32_0 = arith.constant 0 : i32
    %2 = arith.cmpi ne, %1, %c0_i32_0 : i32
    scf.if %2 {
      %c0_98 = arith.constant 0 : index
      %c0_99 = arith.constant 0 : index
      %c0_100 = arith.constant 0 : index
      %179 = vector.load %arg2[%c0_98, %c0_99, %c0_100] : memref<1x32x32xbf16, #tpu.memory_space<vmem>>, vector<1x32x32xbf16>
      %180 = vector.shape_cast %179 : vector<1x32x32xbf16> to vector<32x32xbf16>
      %c0_101 = arith.constant 0 : index
      %c0_102 = arith.constant 0 : index
      %181 = vector.load %arg6[%c0_101, %c0_102] : memref<32x64xbf16, #tpu.memory_space<vmem>>, vector<32x64xbf16>
      %cst_103 = arith.constant dense<0.000000e+00> : vector<32x64xf32>
      %182 = tpu.matmul %180, %181, %cst_103 {dimension_numbers = #tpu.dot_dimension_numbers<[1], [0], [0], [1], [0, 0, 1, 1], [], []>} : vector<32x32xbf16>, vector<32x64xbf16>, vector<32x64xf32> -> vector<32x64xf32>
      %c0_104 = arith.constant 0 : index
      %c0_105 = arith.constant 0 : index
      %183 = vector.load %arg7[%c0_104, %c0_105] : memref<1x64xf32, #tpu.memory_space<vmem>>, vector<1x64xf32>
      %184 = vector.broadcast %183 : vector<1x64xf32> to vector<32x64xf32>
      %185 = arith.addf %182, %184 : vector<32x64xf32>
      %186 = vector.extract_strided_slice %185 {offsets = [0, 0], sizes = [32, 16], strides = [1, 1]} : vector<32x64xf32> to vector<32x16xf32>
      %187 = arith.truncf %186 : vector<32x16xf32> to vector<32x16xbf16>
      %c0_106 = arith.constant 0 : index
      %c0_107 = arith.constant 0 : index
      %c0_108 = arith.constant 0 : index
      %188 = vector.load %arg22[%c0_106, %c0_107, %c0_108] : memref<4x32x16xbf16, #tpu.memory_space<vmem>>, vector<1x32x16xbf16>
      %189 = vector.shape_cast %188 : vector<1x32x16xbf16> to vector<32x16xbf16>
      %190 = vector.shape_cast %187 : vector<32x16xbf16> to vector<1x32x16xbf16>
      tpu.vector_store %arg22[%c0_106, %c0_107, %c0_108], %190 {strides = array<i32>} : memref<4x32x16xbf16, #tpu.memory_space<vmem>>, vector<1x32x16xbf16>,
      %191 = vector.extract_strided_slice %185 {offsets = [0, 16], sizes = [32, 16], strides = [1, 1]} : vector<32x64xf32> to vector<32x16xf32>
      %192 = arith.truncf %191 : vector<32x16xf32> to vector<32x16xbf16>
      %c1_109 = arith.constant 1 : index
      %c0_110 = arith.constant 0 : index
      %c0_111 = arith.constant 0 : index
      %193 = vector.load %arg22[%c1_109, %c0_110, %c0_111] : memref<4x32x16xbf16, #tpu.memory_space<vmem>>, vector<1x32x16xbf16>
      %194 = vector.shape_cast %193 : vector<1x32x16xbf16> to vector<32x16xbf16>
      %195 = vector.shape_cast %192 : vector<32x16xbf16> to vector<1x32x16xbf16>
      tpu.vector_store %arg22[%c1_109, %c0_110, %c0_111], %195 {strides = array<i32>} : memref<4x32x16xbf16, #tpu.memory_space<vmem>>, vector<1x32x16xbf16>,
      %196 = vector.extract_strided_slice %185 {offsets = [0, 32], sizes = [32, 16], strides = [1, 1]} : vector<32x64xf32> to vector<32x16xf32>
      %197 = arith.truncf %196 : vector<32x16xf32> to vector<32x16xbf16>
      %c2_112 = arith.constant 2 : index
      %c0_113 = arith.constant 0 : index
      %c0_114 = arith.constant 0 : index
      %198 = vector.load %arg22[%c2_112, %c0_113, %c0_114] : memref<4x32x16xbf16, #tpu.memory_space<vmem>>, vector<1x32x16xbf16>
      %199 = vector.shape_cast %198 : vector<1x32x16xbf16> to vector<32x16xbf16>
      %200 = vector.shape_cast %197 : vector<32x16xbf16> to vector<1x32x16xbf16>
      tpu.vector_store %arg22[%c2_112, %c0_113, %c0_114], %200 {strides = array<i32>} : memref<4x32x16xbf16, #tpu.memory_space<vmem>>, vector<1x32x16xbf16>,
      %201 = vector.extract_strided_slice %185 {offsets = [0, 48], sizes = [32, 16], strides = [1, 1]} : vector<32x64xf32> to vector<32x16xf32>
      %202 = arith.truncf %201 : vector<32x16xf32> to vector<32x16xbf16>
      %c3_115 = arith.constant 3 : index
      %c0_116 = arith.constant 0 : index
      %c0_117 = arith.constant 0 : index
      %203 = vector.load %arg22[%c3_115, %c0_116, %c0_117] : memref<4x32x16xbf16, #tpu.memory_space<vmem>>, vector<1x32x16xbf16>
      %204 = vector.shape_cast %203 : vector<1x32x16xbf16> to vector<32x16xbf16>
      %205 = vector.shape_cast %202 : vector<32x16xbf16> to vector<1x32x16xbf16>
      tpu.vector_store %arg22[%c3_115, %c0_116, %c0_117], %205 {strides = array<i32>} : memref<4x32x16xbf16, #tpu.memory_space<vmem>>, vector<1x32x16xbf16>,
      %c0_118 = arith.constant 0 : index
      %c0_119 = arith.constant 0 : index
      %206 = vector.load %arg8[%c0_118, %c0_119] : memref<32x64xbf16, #tpu.memory_space<vmem>>, vector<32x64xbf16>
      %cst_120 = arith.constant dense<0.000000e+00> : vector<32x64xf32>
      %207 = tpu.matmul %180, %206, %cst_120 {dimension_numbers = #tpu.dot_dimension_numbers<[1], [0], [0], [1], [0, 0, 1, 1], [], []>} : vector<32x32xbf16>, vector<32x64xbf16>, vector<32x64xf32> -> vector<32x64xf32>
      %c0_121 = arith.constant 0 : index
      %c0_122 = arith.constant 0 : index
      %208 = vector.load %arg9[%c0_121, %c0_122] : memref<1x64xf32, #tpu.memory_space<vmem>>, vector<1x64xf32>
      %209 = vector.broadcast %208 : vector<1x64xf32> to vector<32x64xf32>
      %210 = arith.addf %207, %209 : vector<32x64xf32>
      %211 = vector.extract_strided_slice %210 {offsets = [0, 0], sizes = [32, 16], strides = [1, 1]} : vector<32x64xf32> to vector<32x16xf32>
      %212 = arith.truncf %211 : vector<32x16xf32> to vector<32x16xbf16>
      %c0_123 = arith.constant 0 : index
      %c0_124 = arith.constant 0 : index
      %c0_125 = arith.constant 0 : index
      %213 = vector.load %arg23[%c0_123, %c0_124, %c0_125] : memref<4x32x16xbf16, #tpu.memory_space<vmem>>, vector<1x32x16xbf16>
      %214 = vector.shape_cast %213 : vector<1x32x16xbf16> to vector<32x16xbf16>
      %215 = vector.shape_cast %212 : vector<32x16xbf16> to vector<1x32x16xbf16>
      tpu.vector_store %arg23[%c0_123, %c0_124, %c0_125], %215 {strides = array<i32>} : memref<4x32x16xbf16, #tpu.memory_space<vmem>>, vector<1x32x16xbf16>,
      %216 = vector.extract_strided_slice %210 {offsets = [0, 16], sizes = [32, 16], strides = [1, 1]} : vector<32x64xf32> to vector<32x16xf32>
      %217 = arith.truncf %216 : vector<32x16xf32> to vector<32x16xbf16>
      %c1_126 = arith.constant 1 : index
      %c0_127 = arith.constant 0 : index
      %c0_128 = arith.constant 0 : index
      %218 = vector.load %arg23[%c1_126, %c0_127, %c0_128] : memref<4x32x16xbf16, #tpu.memory_space<vmem>>, vector<1x32x16xbf16>
      %219 = vector.shape_cast %218 : vector<1x32x16xbf16> to vector<32x16xbf16>
      %220 = vector.shape_cast %217 : vector<32x16xbf16> to vector<1x32x16xbf16>
      tpu.vector_store %arg23[%c1_126, %c0_127, %c0_128], %220 {strides = array<i32>} : memref<4x32x16xbf16, #tpu.memory_space<vmem>>, vector<1x32x16xbf16>,
      %221 = vector.extract_strided_slice %210 {offsets = [0, 32], sizes = [32, 16], strides = [1, 1]} : vector<32x64xf32> to vector<32x16xf32>
      %222 = arith.truncf %221 : vector<32x16xf32> to vector<32x16xbf16>
      %c2_129 = arith.constant 2 : index
      %c0_130 = arith.constant 0 : index
      %c0_131 = arith.constant 0 : index
      %223 = vector.load %arg23[%c2_129, %c0_130, %c0_131] : memref<4x32x16xbf16, #tpu.memory_space<vmem>>, vector<1x32x16xbf16>
      %224 = vector.shape_cast %223 : vector<1x32x16xbf16> to vector<32x16xbf16>
      %225 = vector.shape_cast %222 : vector<32x16xbf16> to vector<1x32x16xbf16>
      tpu.vector_store %arg23[%c2_129, %c0_130, %c0_131], %225 {strides = array<i32>} : memref<4x32x16xbf16, #tpu.memory_space<vmem>>, vector<1x32x16xbf16>,
      %226 = vector.extract_strided_slice %210 {offsets = [0, 48], sizes = [32, 16], strides = [1, 1]} : vector<32x64xf32> to vector<32x16xf32>
      %227 = arith.truncf %226 : vector<32x16xf32> to vector<32x16xbf16>
      %c3_132 = arith.constant 3 : index
      %c0_133 = arith.constant 0 : index
      %c0_134 = arith.constant 0 : index
      %228 = vector.load %arg23[%c3_132, %c0_133, %c0_134] : memref<4x32x16xbf16, #tpu.memory_space<vmem>>, vector<1x32x16xbf16>
      %229 = vector.shape_cast %228 : vector<1x32x16xbf16> to vector<32x16xbf16>
      %230 = vector.shape_cast %227 : vector<32x16xbf16> to vector<1x32x16xbf16>
      tpu.vector_store %arg23[%c3_132, %c0_133, %c0_134], %230 {strides = array<i32>} : memref<4x32x16xbf16, #tpu.memory_space<vmem>>, vector<1x32x16xbf16>,
    } else {
    }
    %c0 = arith.constant 0 : index
    %c0_1 = arith.constant 0 : index
    %c0_2 = arith.constant 0 : index
    %3 = vector.load %arg3[%c0, %c0_1, %c0_2] : memref<1x16x32xf32, #tpu.memory_space<vmem>>, vector<1x16x32xf32>
    %4 = vector.shape_cast %3 : vector<1x16x32xf32> to vector<16x32xf32>
    %5 = arith.truncf %4 : vector<16x32xf32> to vector<16x32xbf16>
    %c0_3 = arith.constant 0 : index
    %c0_4 = arith.constant 0 : index
    %6 = vector.load %arg4[%c0_3, %c0_4] : memref<32x64xbf16, #tpu.memory_space<vmem>>, vector<32x64xbf16>
    %cst = arith.constant dense<0.000000e+00> : vector<16x64xf32>
    %7 = tpu.matmul %5, %6, %cst {dimension_numbers = #tpu.dot_dimension_numbers<[1], [0], [0], [1], [0, 0, 1, 1], [], []>} : vector<16x32xbf16>, vector<32x64xbf16>, vector<16x64xf32> -> vector<16x64xf32>
    %c0_5 = arith.constant 0 : index
    %c0_6 = arith.constant 0 : index
    %8 = vector.load %arg5[%c0_5, %c0_6] : memref<1x64xf32, #tpu.memory_space<vmem>>, vector<1x64xf32>
    %9 = vector.broadcast %8 : vector<1x64xf32> to vector<16x64xf32>
    %10 = arith.addf %7, %9 : vector<16x64xf32>
    %cst_7 = arith.constant 2.500000e-01 : f32
    %11 = vector.broadcast %cst_7 : f32 to vector<16x64xf32>
    %12 = arith.mulf %10, %11 : vector<16x64xf32>
    %13 = vector.extract_strided_slice %12 {offsets = [0, 0], sizes = [16, 16], strides = [1, 1]} : vector<16x64xf32> to vector<16x16xf32>
    %14 = arith.truncf %13 : vector<16x16xf32> to vector<16x16xbf16>
    %c0_8 = arith.constant 0 : index
    %c0_9 = arith.constant 0 : index
    %c0_10 = arith.constant 0 : index
    %15 = vector.load %arg22[%c0_8, %c0_9, %c0_10] : memref<4x32x16xbf16, #tpu.memory_space<vmem>>, vector<1x32x16xbf16>
    %16 = vector.shape_cast %15 : vector<1x32x16xbf16> to vector<32x16xbf16>
    %cst_11 = arith.constant dense<0.000000e+00> : vector<16x32xf32>
    %17 = tpu.matmul %14, %16, %cst_11 {dimension_numbers = #tpu.dot_dimension_numbers<[1], [1], [0], [0], [0, 0, 1, 0], [], []>} : vector<16x16xbf16>, vector<32x16xbf16>, vector<16x32xf32> -> vector<16x32xf32>
    %cst_12 = arith.constant dense<0xFF800000> : vector<16xf32>
    %18 = vector.multi_reduction <maximumf>, %17, %cst_12 [1] : vector<16x32xf32> to vector<16xf32>
    %19 = vector.shape_cast %18 : vector<16xf32> to vector<16x1xf32>
    %20 = vector.broadcast %19 : vector<16x1xf32> to vector<16x32xf32>
    %21 = arith.subf %17, %20 : vector<16x32xf32>
    %22 = math.exp %21 : vector<16x32xf32>
    %cst_13 = arith.constant dense<0.000000e+00> : vector<16xf32>
    %23 = vector.multi_reduction <add>, %22, %cst_13 [1] : vector<16x32xf32> to vector<16xf32>
    %24 = vector.shape_cast %23 : vector<16xf32> to vector<16x1xf32>
    %25 = tpu.reciprocal %24 {approx = true} : vector<16x1xf32> -> vector<16x1xf32>
    %26 = vector.broadcast %25 : vector<16x1xf32> to vector<16x32xf32>
    %27 = arith.mulf %22, %26 : vector<16x32xf32>
    %28 = arith.truncf %27 : vector<16x32xf32> to vector<16x32xbf16>
    %c0_14 = arith.constant 0 : index
    %c0_15 = arith.constant 0 : index
    %c0_16 = arith.constant 0 : index
    %c0_17 = arith.constant 0 : index
    %29 = vector.load %arg21[%c0_14, %c0_15, %c0_16, %c0_17] : memref<1x4x16x32xbf16, #tpu.memory_space<vmem>>, vector<1x1x16x32xbf16>
    %30 = vector.shape_cast %29 : vector<1x1x16x32xbf16> to vector<16x32xbf16>
    %31 = vector.shape_cast %28 : vector<16x32xbf16> to vector<1x1x16x32xbf16>
    tpu.vector_store %arg21[%c0_14, %c0_15, %c0_16, %c0_17], %31 {strides = array<i32>} : memref<1x4x16x32xbf16, #tpu.memory_space<vmem>>, vector<1x1x16x32xbf16>,
    %32 = arith.truncf %27 : vector<16x32xf32> to vector<16x32xbf16>
    %c0_18 = arith.constant 0 : index
    %c0_19 = arith.constant 0 : index
    %c0_20 = arith.constant 0 : index
    %33 = vector.load %arg23[%c0_18, %c0_19, %c0_20] : memref<4x32x16xbf16, #tpu.memory_space<vmem>>, vector<1x32x16xbf16>
    %34 = vector.shape_cast %33 : vector<1x32x16xbf16> to vector<32x16xbf16>
    %cst_21 = arith.constant dense<0.000000e+00> : vector<16x16xf32>
    %35 = tpu.matmul %32, %34, %cst_21 {dimension_numbers = #tpu.dot_dimension_numbers<[1], [0], [0], [1], [0, 0, 1, 1], [], []>} : vector<16x32xbf16>, vector<32x16xbf16>, vector<16x16xf32> -> vector<16x16xf32>
    %36 = vector.extract_strided_slice %12 {offsets = [0, 16], sizes = [16, 16], strides = [1, 1]} : vector<16x64xf32> to vector<16x16xf32>
    %37 = arith.truncf %36 : vector<16x16xf32> to vector<16x16xbf16>
    %c1 = arith.constant 1 : index
    %c0_22 = arith.constant 0 : index
    %c0_23 = arith.constant 0 : index
    %38 = vector.load %arg22[%c1, %c0_22, %c0_23] : memref<4x32x16xbf16, #tpu.memory_space<vmem>>, vector<1x32x16xbf16>
    %39 = vector.shape_cast %38 : vector<1x32x16xbf16> to vector<32x16xbf16>
    %cst_24 = arith.constant dense<0.000000e+00> : vector<16x32xf32>
    %40 = tpu.matmul %37, %39, %cst_24 {dimension_numbers = #tpu.dot_dimension_numbers<[1], [1], [0], [0], [0, 0, 1, 0], [], []>} : vector<16x16xbf16>, vector<32x16xbf16>, vector<16x32xf32> -> vector<16x32xf32>
    %cst_25 = arith.constant dense<0xFF800000> : vector<16xf32>
    %41 = vector.multi_reduction <maximumf>, %40, %cst_25 [1] : vector<16x32xf32> to vector<16xf32>
    %42 = vector.shape_cast %41 : vector<16xf32> to vector<16x1xf32>
    %43 = vector.broadcast %42 : vector<16x1xf32> to vector<16x32xf32>
    %44 = arith.subf %40, %43 : vector<16x32xf32>
    %45 = math.exp %44 : vector<16x32xf32>
    %cst_26 = arith.constant dense<0.000000e+00> : vector<16xf32>
    %46 = vector.multi_reduction <add>, %45, %cst_26 [1] : vector<16x32xf32> to vector<16xf32>
    %47 = vector.shape_cast %46 : vector<16xf32> to vector<16x1xf32>
    %48 = tpu.reciprocal %47 {approx = true} : vector<16x1xf32> -> vector<16x1xf32>
    %49 = vector.broadcast %48 : vector<16x1xf32> to vector<16x32xf32>
    %50 = arith.mulf %45, %49 : vector<16x32xf32>
    %51 = arith.truncf %50 : vector<16x32xf32> to vector<16x32xbf16>
    %c0_27 = arith.constant 0 : index
    %c1_28 = arith.constant 1 : index
    %c0_29 = arith.constant 0 : index
    %c0_30 = arith.constant 0 : index
    %52 = vector.load %arg21[%c0_27, %c1_28, %c0_29, %c0_30] : memref<1x4x16x32xbf16, #tpu.memory_space<vmem>>, vector<1x1x16x32xbf16>
    %53 = vector.shape_cast %52 : vector<1x1x16x32xbf16> to vector<16x32xbf16>
    %54 = vector.shape_cast %51 : vector<16x32xbf16> to vector<1x1x16x32xbf16>
    tpu.vector_store %arg21[%c0_27, %c1_28, %c0_29, %c0_30], %54 {strides = array<i32>} : memref<1x4x16x32xbf16, #tpu.memory_space<vmem>>, vector<1x1x16x32xbf16>,
    %55 = arith.truncf %50 : vector<16x32xf32> to vector<16x32xbf16>
    %c1_31 = arith.constant 1 : index
    %c0_32 = arith.constant 0 : index
    %c0_33 = arith.constant 0 : index
    %56 = vector.load %arg23[%c1_31, %c0_32, %c0_33] : memref<4x32x16xbf16, #tpu.memory_space<vmem>>, vector<1x32x16xbf16>
    %57 = vector.shape_cast %56 : vector<1x32x16xbf16> to vector<32x16xbf16>
    %cst_34 = arith.constant dense<0.000000e+00> : vector<16x16xf32>
    %58 = tpu.matmul %55, %57, %cst_34 {dimension_numbers = #tpu.dot_dimension_numbers<[1], [0], [0], [1], [0, 0, 1, 1], [], []>} : vector<16x32xbf16>, vector<32x16xbf16>, vector<16x16xf32> -> vector<16x16xf32>
    %59 = vector.extract_strided_slice %12 {offsets = [0, 32], sizes = [16, 16], strides = [1, 1]} : vector<16x64xf32> to vector<16x16xf32>
    %60 = arith.truncf %59 : vector<16x16xf32> to vector<16x16xbf16>
    %c2 = arith.constant 2 : index
    %c0_35 = arith.constant 0 : index
    %c0_36 = arith.constant 0 : index
    %61 = vector.load %arg22[%c2, %c0_35, %c0_36] : memref<4x32x16xbf16, #tpu.memory_space<vmem>>, vector<1x32x16xbf16>
    %62 = vector.shape_cast %61 : vector<1x32x16xbf16> to vector<32x16xbf16>
    %cst_37 = arith.constant dense<0.000000e+00> : vector<16x32xf32>
    %63 = tpu.matmul %60, %62, %cst_37 {dimension_numbers = #tpu.dot_dimension_numbers<[1], [1], [0], [0], [0, 0, 1, 0], [], []>} : vector<16x16xbf16>, vector<32x16xbf16>, vector<16x32xf32> -> vector<16x32xf32>
    %cst_38 = arith.constant dense<0xFF800000> : vector<16xf32>
    %64 = vector.multi_reduction <maximumf>, %63, %cst_38 [1] : vector<16x32xf32> to vector<16xf32>
    %65 = vector.shape_cast %64 : vector<16xf32> to vector<16x1xf32>
    %66 = vector.broadcast %65 : vector<16x1xf32> to vector<16x32xf32>
    %67 = arith.subf %63, %66 : vector<16x32xf32>
    %68 = math.exp %67 : vector<16x32xf32>
    %cst_39 = arith.constant dense<0.000000e+00> : vector<16xf32>
    %69 = vector.multi_reduction <add>, %68, %cst_39 [1] : vector<16x32xf32> to vector<16xf32>
    %70 = vector.shape_cast %69 : vector<16xf32> to vector<16x1xf32>
    %71 = tpu.reciprocal %70 {approx = true} : vector<16x1xf32> -> vector<16x1xf32>
    %72 = vector.broadcast %71 : vector<16x1xf32> to vector<16x32xf32>
    %73 = arith.mulf %68, %72 : vector<16x32xf32>
    %74 = arith.truncf %73 : vector<16x32xf32> to vector<16x32xbf16>
    %c0_40 = arith.constant 0 : index
    %c2_41 = arith.constant 2 : index
    %c0_42 = arith.constant 0 : index
    %c0_43 = arith.constant 0 : index
    %75 = vector.load %arg21[%c0_40, %c2_41, %c0_42, %c0_43] : memref<1x4x16x32xbf16, #tpu.memory_space<vmem>>, vector<1x1x16x32xbf16>
    %76 = vector.shape_cast %75 : vector<1x1x16x32xbf16> to vector<16x32xbf16>
    %77 = vector.shape_cast %74 : vector<16x32xbf16> to vector<1x1x16x32xbf16>
    tpu.vector_store %arg21[%c0_40, %c2_41, %c0_42, %c0_43], %77 {strides = array<i32>} : memref<1x4x16x32xbf16, #tpu.memory_space<vmem>>, vector<1x1x16x32xbf16>,
    %78 = arith.truncf %73 : vector<16x32xf32> to vector<16x32xbf16>
    %c2_44 = arith.constant 2 : index
    %c0_45 = arith.constant 0 : index
    %c0_46 = arith.constant 0 : index
    %79 = vector.load %arg23[%c2_44, %c0_45, %c0_46] : memref<4x32x16xbf16, #tpu.memory_space<vmem>>, vector<1x32x16xbf16>
    %80 = vector.shape_cast %79 : vector<1x32x16xbf16> to vector<32x16xbf16>
    %cst_47 = arith.constant dense<0.000000e+00> : vector<16x16xf32>
    %81 = tpu.matmul %78, %80, %cst_47 {dimension_numbers = #tpu.dot_dimension_numbers<[1], [0], [0], [1], [0, 0, 1, 1], [], []>} : vector<16x32xbf16>, vector<32x16xbf16>, vector<16x16xf32> -> vector<16x16xf32>
    %82 = vector.extract_strided_slice %12 {offsets = [0, 48], sizes = [16, 16], strides = [1, 1]} : vector<16x64xf32> to vector<16x16xf32>
    %83 = arith.truncf %82 : vector<16x16xf32> to vector<16x16xbf16>
    %c3 = arith.constant 3 : index
    %c0_48 = arith.constant 0 : index
    %c0_49 = arith.constant 0 : index
    %84 = vector.load %arg22[%c3, %c0_48, %c0_49] : memref<4x32x16xbf16, #tpu.memory_space<vmem>>, vector<1x32x16xbf16>
    %85 = vector.shape_cast %84 : vector<1x32x16xbf16> to vector<32x16xbf16>
    %cst_50 = arith.constant dense<0.000000e+00> : vector<16x32xf32>
    %86 = tpu.matmul %83, %85, %cst_50 {dimension_numbers = #tpu.dot_dimension_numbers<[1], [1], [0], [0], [0, 0, 1, 0], [], []>} : vector<16x16xbf16>, vector<32x16xbf16>, vector<16x32xf32> -> vector<16x32xf32>
    %cst_51 = arith.constant dense<0xFF800000> : vector<16xf32>
    %87 = vector.multi_reduction <maximumf>, %86, %cst_51 [1] : vector<16x32xf32> to vector<16xf32>
    %88 = vector.shape_cast %87 : vector<16xf32> to vector<16x1xf32>
    %89 = vector.broadcast %88 : vector<16x1xf32> to vector<16x32xf32>
    %90 = arith.subf %86, %89 : vector<16x32xf32>
    %91 = math.exp %90 : vector<16x32xf32>
    %cst_52 = arith.constant dense<0.000000e+00> : vector<16xf32>
    %92 = vector.multi_reduction <add>, %91, %cst_52 [1] : vector<16x32xf32> to vector<16xf32>
    %93 = vector.shape_cast %92 : vector<16xf32> to vector<16x1xf32>
    %94 = tpu.reciprocal %93 {approx = true} : vector<16x1xf32> -> vector<16x1xf32>
    %95 = vector.broadcast %94 : vector<16x1xf32> to vector<16x32xf32>
    %96 = arith.mulf %91, %95 : vector<16x32xf32>
    %97 = arith.truncf %96 : vector<16x32xf32> to vector<16x32xbf16>
    %c0_53 = arith.constant 0 : index
    %c3_54 = arith.constant 3 : index
    %c0_55 = arith.constant 0 : index
    %c0_56 = arith.constant 0 : index
    %98 = vector.load %arg21[%c0_53, %c3_54, %c0_55, %c0_56] : memref<1x4x16x32xbf16, #tpu.memory_space<vmem>>, vector<1x1x16x32xbf16>
    %99 = vector.shape_cast %98 : vector<1x1x16x32xbf16> to vector<16x32xbf16>
    %100 = vector.shape_cast %97 : vector<16x32xbf16> to vector<1x1x16x32xbf16>
    tpu.vector_store %arg21[%c0_53, %c3_54, %c0_55, %c0_56], %100 {strides = array<i32>} : memref<1x4x16x32xbf16, #tpu.memory_space<vmem>>, vector<1x1x16x32xbf16>,
    %101 = arith.truncf %96 : vector<16x32xf32> to vector<16x32xbf16>
    %c3_57 = arith.constant 3 : index
    %c0_58 = arith.constant 0 : index
    %c0_59 = arith.constant 0 : index
    %102 = vector.load %arg23[%c3_57, %c0_58, %c0_59] : memref<4x32x16xbf16, #tpu.memory_space<vmem>>, vector<1x32x16xbf16>
    %103 = vector.shape_cast %102 : vector<1x32x16xbf16> to vector<32x16xbf16>
    %cst_60 = arith.constant dense<0.000000e+00> : vector<16x16xf32>
    %104 = tpu.matmul %101, %103, %cst_60 {dimension_numbers = #tpu.dot_dimension_numbers<[1], [0], [0], [1], [0, 0, 1, 1], [], []>} : vector<16x32xbf16>, vector<32x16xbf16>, vector<16x16xf32> -> vector<16x16xf32>
    %105 = tpu.concatenate %35, %58, %81, %104 in 1 : vector<16x16xf32>, vector<16x16xf32>, vector<16x16xf32>, vector<16x16xf32> -> vector<16x64xf32>
    %106 = arith.truncf %105 : vector<16x64xf32> to vector<16x64xbf16>
    %c0_61 = arith.constant 0 : index
    %c0_62 = arith.constant 0 : index
    %107 = vector.load %arg10[%c0_61, %c0_62] : memref<64x32xbf16, #tpu.memory_space<vmem>>, vector<64x32xbf16>
    %cst_63 = arith.constant dense<0.000000e+00> : vector<16x32xf32>
    %108 = tpu.matmul %106, %107, %cst_63 {dimension_numbers = #tpu.dot_dimension_numbers<[1], [0], [0], [1], [0, 0, 1, 1], [], []>} : vector<16x64xbf16>, vector<64x32xbf16>, vector<16x32xf32> -> vector<16x32xf32>
    %c0_64 = arith.constant 0 : index
    %c0_65 = arith.constant 0 : index
    %109 = vector.load %arg11[%c0_64, %c0_65] : memref<1x32xf32, #tpu.memory_space<vmem>>, vector<1x32xf32>
    %110 = vector.broadcast %109 : vector<1x32xf32> to vector<16x32xf32>
    %111 = arith.addf %108, %110 : vector<16x32xf32>
    %112 = arith.addf %111, %4 : vector<16x32xf32>
    %c0_66 = arith.constant 0 : index
    %c0_67 = arith.constant 0 : index
    %113 = vector.load %arg12[%c0_66, %c0_67] : memref<1x32xf32, #tpu.memory_space<vmem>>, vector<1x32xf32>
    %c0_68 = arith.constant 0 : index
    %c0_69 = arith.constant 0 : index
    %114 = vector.load %arg13[%c0_68, %c0_69] : memref<1x32xf32, #tpu.memory_space<vmem>>, vector<1x32xf32>
    %cst_70 = arith.constant dense<0.000000e+00> : vector<16xf32>
    %115 = vector.multi_reduction <add>, %112, %cst_70 [1] : vector<16x32xf32> to vector<16xf32>
    %116 = vector.shape_cast %115 : vector<16xf32> to vector<16x1xf32>
    %cst_71 = arith.constant 3.200000e+01 : f32
    %117 = vector.broadcast %cst_71 : f32 to vector<16x1xf32>
    %118 = arith.divf %116, %117 : vector<16x1xf32>
    %119 = vector.broadcast %118 : vector<16x1xf32> to vector<16x32xf32>
    %120 = arith.subf %112, %119 : vector<16x32xf32>
    %121 = arith.mulf %120, %120 : vector<16x32xf32>
    %cst_72 = arith.constant dense<0.000000e+00> : vector<16xf32>
    %122 = vector.multi_reduction <add>, %121, %cst_72 [1] : vector<16x32xf32> to vector<16xf32>
    %123 = vector.shape_cast %122 : vector<16xf32> to vector<16x1xf32>
    %cst_73 = arith.constant 3.200000e+01 : f32
    %124 = vector.broadcast %cst_73 : f32 to vector<16x1xf32>
    %125 = arith.divf %123, %124 : vector<16x1xf32>
    %126 = vector.broadcast %118 : vector<16x1xf32> to vector<16x32xf32>
    %127 = arith.subf %112, %126 : vector<16x32xf32>
    %cst_74 = arith.constant 9.99999974E-6 : f32
    %128 = vector.broadcast %cst_74 : f32 to vector<16x1xf32>
    %129 = arith.addf %125, %128 : vector<16x1xf32>
    %130 = math.rsqrt %129 : vector<16x1xf32>
    %131 = vector.broadcast %130 : vector<16x1xf32> to vector<16x32xf32>
    %132 = arith.mulf %127, %131 : vector<16x32xf32>
    %133 = vector.broadcast %113 : vector<1x32xf32> to vector<16x32xf32>
    %134 = arith.mulf %132, %133 : vector<16x32xf32>
    %135 = vector.broadcast %114 : vector<1x32xf32> to vector<16x32xf32>
    %136 = arith.addf %134, %135 : vector<16x32xf32>
    %137 = arith.truncf %136 : vector<16x32xf32> to vector<16x32xbf16>
    %c0_75 = arith.constant 0 : index
    %c0_76 = arith.constant 0 : index
    %138 = vector.load %arg14[%c0_75, %c0_76] : memref<32x64xbf16, #tpu.memory_space<vmem>>, vector<32x64xbf16>
    %cst_77 = arith.constant dense<0.000000e+00> : vector<16x64xf32>
    %139 = tpu.matmul %137, %138, %cst_77 {dimension_numbers = #tpu.dot_dimension_numbers<[1], [0], [0], [1], [0, 0, 1, 1], [], []>} : vector<16x32xbf16>, vector<32x64xbf16>, vector<16x64xf32> -> vector<16x64xf32>
    %c0_78 = arith.constant 0 : index
    %c0_79 = arith.constant 0 : index
    %140 = vector.load %arg15[%c0_78, %c0_79] : memref<1x64xf32, #tpu.memory_space<vmem>>, vector<1x64xf32>
    %141 = vector.broadcast %140 : vector<1x64xf32> to vector<16x64xf32>
    %142 = arith.addf %139, %141 : vector<16x64xf32>
    %cst_80 = arith.constant 0.000000e+00 : f32
    %143 = vector.broadcast %cst_80 : f32 to vector<16x64xf32>
    %144 = arith.maximumf %142, %143 : vector<16x64xf32>
    %145 = arith.truncf %144 : vector<16x64xf32> to vector<16x64xbf16>
    %c0_81 = arith.constant 0 : index
    %c0_82 = arith.constant 0 : index
    %146 = vector.load %arg16[%c0_81, %c0_82] : memref<64x32xbf16, #tpu.memory_space<vmem>>, vector<64x32xbf16>
    %cst_83 = arith.constant dense<0.000000e+00> : vector<16x32xf32>
    %147 = tpu.matmul %145, %146, %cst_83 {dimension_numbers = #tpu.dot_dimension_numbers<[1], [0], [0], [1], [0, 0, 1, 1], [], []>} : vector<16x64xbf16>, vector<64x32xbf16>, vector<16x32xf32> -> vector<16x32xf32>
    %c0_84 = arith.constant 0 : index
    %c0_85 = arith.constant 0 : index
    %148 = vector.load %arg17[%c0_84, %c0_85] : memref<1x32xf32, #tpu.memory_space<vmem>>, vector<1x32xf32>
    %149 = vector.broadcast %148 : vector<1x32xf32> to vector<16x32xf32>
    %150 = arith.addf %147, %149 : vector<16x32xf32>
    %151 = arith.addf %150, %136 : vector<16x32xf32>
    %c0_86 = arith.constant 0 : index
    %c0_87 = arith.constant 0 : index
    %152 = vector.load %arg18[%c0_86, %c0_87] : memref<1x32xf32, #tpu.memory_space<vmem>>, vector<1x32xf32>
    %c0_88 = arith.constant 0 : index
    %c0_89 = arith.constant 0 : index
    %153 = vector.load %arg19[%c0_88, %c0_89] : memref<1x32xf32, #tpu.memory_space<vmem>>, vector<1x32xf32>
    %cst_90 = arith.constant dense<0.000000e+00> : vector<16xf32>
    %154 = vector.multi_reduction <add>, %151, %cst_90 [1] : vector<16x32xf32> to vector<16xf32>
    %155 = vector.shape_cast %154 : vector<16xf32> to vector<16x1xf32>
    %cst_91 = arith.constant 3.200000e+01 : f32
    %156 = vector.broadcast %cst_91 : f32 to vector<16x1xf32>
    %157 = arith.divf %155, %156 : vector<16x1xf32>
    %158 = vector.broadcast %157 : vector<16x1xf32> to vector<16x32xf32>
    %159 = arith.subf %151, %158 : vector<16x32xf32>
    %160 = arith.mulf %159, %159 : vector<16x32xf32>
    %cst_92 = arith.constant dense<0.000000e+00> : vector<16xf32>
    %161 = vector.multi_reduction <add>, %160, %cst_92 [1] : vector<16x32xf32> to vector<16xf32>
    %162 = vector.shape_cast %161 : vector<16xf32> to vector<16x1xf32>
    %cst_93 = arith.constant 3.200000e+01 : f32
    %163 = vector.broadcast %cst_93 : f32 to vector<16x1xf32>
    %164 = arith.divf %162, %163 : vector<16x1xf32>
    %165 = vector.broadcast %157 : vector<16x1xf32> to vector<16x32xf32>
    %166 = arith.subf %151, %165 : vector<16x32xf32>
    %cst_94 = arith.constant 9.99999974E-6 : f32
    %167 = vector.broadcast %cst_94 : f32 to vector<16x1xf32>
    %168 = arith.addf %164, %167 : vector<16x1xf32>
    %169 = math.rsqrt %168 : vector<16x1xf32>
    %170 = vector.broadcast %169 : vector<16x1xf32> to vector<16x32xf32>
    %171 = arith.mulf %166, %170 : vector<16x32xf32>
    %172 = vector.broadcast %152 : vector<1x32xf32> to vector<16x32xf32>
    %173 = arith.mulf %171, %172 : vector<16x32xf32>
    %174 = vector.broadcast %153 : vector<1x32xf32> to vector<16x32xf32>
    %175 = arith.addf %173, %174 : vector<16x32xf32>
    %c0_95 = arith.constant 0 : index
    %c0_96 = arith.constant 0 : index
    %c0_97 = arith.constant 0 : index
    %176 = vector.load %arg20[%c0_95, %c0_96, %c0_97] : memref<1x16x32xf32, #tpu.memory_space<vmem>>, vector<1x16x32xf32>
    %177 = vector.shape_cast %176 : vector<1x16x32xf32> to vector<16x32xf32>
    %178 = vector.shape_cast %175 : vector<16x32xf32> to vector<1x16x32xf32>
    tpu.vector_store %arg20[%c0_95, %c0_96, %c0_97], %178 {strides = array<i32>} : memref<1x16x32xf32, #tpu.memory_space<vmem>>, vector<1x16x32xf32>,
    return
  }
  func.func @transform_0(%arg0: i32, %arg1: i32) -> (i32, i32, i32) {
    %c0_i32 = arith.constant 0 : i32
    %c0_i32_0 = arith.constant 0 : i32
    %c0_i32_1 = arith.constant 0 : i32
    return %arg0, %c0_i32, %c0_i32_0 : i32, i32, i32
  }
  func.func @transform_1(%arg0: i32, %arg1: i32) -> (i32, i32, i32) {
    %c0_i32 = arith.constant 0 : i32
    %c0_i32_0 = arith.constant 0 : i32
    return %arg0, %arg1, %c0_i32 : i32, i32, i32
  }
  func.func @transform_2(%arg0: i32, %arg1: i32) -> (i32, i32) {
    %c0_i32 = arith.constant 0 : i32
    %c0_i32_0 = arith.constant 0 : i32
    %c0_i32_1 = arith.constant 0 : i32
    return %c0_i32, %c0_i32_0 : i32, i32
  }
  func.func @transform_3(%arg0: i32, %arg1: i32) -> (i32, i32) {
    %c0_i32 = arith.constant 0 : i32
    %c0_i32_0 = arith.constant 0 : i32
    %c0_i32_1 = arith.constant 0 : i32
    return %c0_i32, %c0_i32_0 : i32, i32
  }
  func.func @transform_4(%arg0: i32, %arg1: i32) -> (i32, i32) {
    %c0_i32 = arith.constant 0 : i32
    %c0_i32_0 = arith.constant 0 : i32
    %c0_i32_1 = arith.constant 0 : i32
    return %c0_i32, %c0_i32_0 : i32, i32
  }
  func.func @transform_5(%arg0: i32, %arg1: i32) -> (i32, i32) {
    %c0_i32 = arith.constant 0 : i32
    %c0_i32_0 = arith.constant 0 : i32
    %c0_i32_1 = arith.constant 0 : i32
    return %c0_i32, %c0_i32_0 : i32, i32
  }
  func.func @transform_6(%arg0: i32, %arg1: i32) -> (i32, i32) {
    %c0_i32 = arith.constant 0 : i32
    %c0_i32_0 = arith.constant 0 : i32
    %c0_i32_1 = arith.constant 0 : i32
    return %c0_i32, %c0_i32_0 : i32, i32
  }
  func.func @transform_7(%arg0: i32, %arg1: i32) -> (i32, i32) {
    %c0_i32 = arith.constant 0 : i32
    %c0_i32_0 = arith.constant 0 : i32
    %c0_i32_1 = arith.constant 0 : i32
    return %c0_i32, %c0_i32_0 : i32, i32
  }
  func.func @transform_8(%arg0: i32, %arg1: i32) -> (i32, i32) {
    %c0_i32 = arith.constant 0 : i32
    %c0_i32_0 = arith.constant 0 : i32
    %c0_i32_1 = arith.constant 0 : i32
    return %c0_i32, %c0_i32_0 : i32, i32
  }
  func.func @transform_9(%arg0: i32, %arg1: i32) -> (i32, i32) {
    %c0_i32 = arith.constant 0 : i32
    %c0_i32_0 = arith.constant 0 : i32
    %c0_i32_1 = arith.constant 0 : i32
    return %c0_i32, %c0_i32_0 : i32, i32
  }
  func.func @transform_10(%arg0: i32, %arg1: i32) -> (i32, i32) {
    %c0_i32 = arith.constant 0 : i32
    %c0_i32_0 = arith.constant 0 : i32
    %c0_i32_1 = arith.constant 0 : i32
    return %c0_i32, %c0_i32_0 : i32, i32
  }
  func.func @transform_11(%arg0: i32, %arg1: i32) -> (i32, i32) {
    %c0_i32 = arith.constant 0 : i32
    %c0_i32_0 = arith.constant 0 : i32
    %c0_i32_1 = arith.constant 0 : i32
    return %c0_i32, %c0_i32_0 : i32, i32
  }
  func.func @transform_12(%arg0: i32, %arg1: i32) -> (i32, i32) {
    %c0_i32 = arith.constant 0 : i32
    %c0_i32_0 = arith.constant 0 : i32
    %c0_i32_1 = arith.constant 0 : i32
    return %c0_i32, %c0_i32_0 : i32, i32
  }
  func.func @transform_13(%arg0: i32, %arg1: i32) -> (i32, i32) {
    %c0_i32 = arith.constant 0 : i32
    %c0_i32_0 = arith.constant 0 : i32
    %c0_i32_1 = arith.constant 0 : i32
    return %c0_i32, %c0_i32_0 : i32, i32
  }
  func.func @transform_14(%arg0: i32, %arg1: i32) -> (i32, i32) {
    %c0_i32 = arith.constant 0 : i32
    %c0_i32_0 = arith.constant 0 : i32
    %c0_i32_1 = arith.constant 0 : i32
    return %c0_i32, %c0_i32_0 : i32, i32
  }
  func.func @transform_15(%arg0: i32, %arg1: i32) -> (i32, i32) {
    %c0_i32 = arith.constant 0 : i32
    %c0_i32_0 = arith.constant 0 : i32
    %c0_i32_1 = arith.constant 0 : i32
    return %c0_i32, %c0_i32_0 : i32, i32
  }
  func.func @transform_16(%arg0: i32, %arg1: i32) -> (i32, i32) {
    %c0_i32 = arith.constant 0 : i32
    %c0_i32_0 = arith.constant 0 : i32
    %c0_i32_1 = arith.constant 0 : i32
    return %c0_i32, %c0_i32_0 : i32, i32
  }
  func.func @transform_17(%arg0: i32, %arg1: i32) -> (i32, i32) {
    %c0_i32 = arith.constant 0 : i32
    %c0_i32_0 = arith.constant 0 : i32
    %c0_i32_1 = arith.constant 0 : i32
    return %c0_i32, %c0_i32_0 : i32, i32
  }
  func.func @transform_18(%arg0: i32, %arg1: i32) -> (i32, i32, i32) {
    %c0_i32 = arith.constant 0 : i32
    %c0_i32_0 = arith.constant 0 : i32
    return %arg0, %arg1, %c0_i32 : i32, i32, i32
  }
  func.func @transform_19(%arg0: i32, %arg1: i32) -> (i32, i32, i32, i32) {
    %c0_i32 = arith.constant 0 : i32
    %c0_i32_0 = arith.constant 0 : i32
    %c0_i32_1 = arith.constant 0 : i32
    return %arg0, %c0_i32, %arg1, %c0_i32_0 : i32, i32, i32, i32
  }
}

</mosaic_0001>

<llo_original>
// kernel: tpu_custom_call.1
$region0: #{tpu_custom_call.1}
  #allocation0 [shape = 'u32[]', space=smem, size = 0x4, offset = 0x4, fixed_abs, tag = 'smem constant byte address 0x4 - core index']
  #allocation1 [shape = 'u32[144,128]{1,0:T(1,128)}', space=vmem, size = 0x12000, scoped, tag = 'internal scratch']
  #allocation2 [shape = 'bf16[4,32,16]{2,1,0:T(16,128)(2,1)}', space=vmem, size = 0x8000, scoped, tag = 'scratch operand']
  #allocation3 [shape = 'bf16[4,32,16]{2,1,0:T(16,128)(2,1)}', space=vmem, size = 0x8000, scoped, tag = 'scratch operand']
  #allocation36 [shape = 's32[]', space=sflag, size = 0x4, offset = 0, fixed_abs, tag = 'sflag constant byte address 0x0 - dummy sync flag']
  %s0 = inlined_call_operand.hbm [shape: bf16[2,32,32], index: 0, kind: input, shape index: {}]
  %s1 = inlined_call_operand.hbm [shape: f32[2,32,32], index: 1, kind: input, shape index: {}]
  %s2 = inlined_call_operand.hbm [shape: bf16[32,64], index: 2, kind: input, shape index: {}]
  %s3 = inlined_call_operand.hbm [shape: f32[1,64], index: 3, kind: input, shape index: {}]
  %s4 = inlined_call_operand.hbm [shape: bf16[32,64], index: 4, kind: input, shape index: {}]
  %s5 = inlined_call_operand.hbm [shape: f32[1,64], index: 5, kind: input, shape index: {}]
  %s6 = inlined_call_operand.hbm [shape: bf16[32,64], index: 6, kind: input, shape index: {}]
  %s7 = inlined_call_operand.hbm [shape: f32[1,64], index: 7, kind: input, shape index: {}]
  %s8 = inlined_call_operand.hbm [shape: bf16[64,32], index: 8, kind: input, shape index: {}]
  %s9 = inlined_call_operand.hbm [shape: f32[1,32], index: 9, kind: input, shape index: {}]
  %s10 = inlined_call_operand.hbm [shape: f32[1,32], index: 10, kind: input, shape index: {}]
  %s11 = inlined_call_operand.hbm [shape: f32[1,32], index: 11, kind: input, shape index: {}]
  %s12 = inlined_call_operand.hbm [shape: bf16[32,64], index: 12, kind: input, shape index: {}]
  %s13 = inlined_call_operand.hbm [shape: f32[1,64], index: 13, kind: input, shape index: {}]
  %s14 = inlined_call_operand.hbm [shape: bf16[64,32], index: 14, kind: input, shape index: {}]
  %s15 = inlined_call_operand.hbm [shape: f32[1,32], index: 15, kind: input, shape index: {}]
  %s16 = inlined_call_operand.hbm [shape: f32[1,32], index: 16, kind: input, shape index: {}]
  %s17 = inlined_call_operand.hbm [shape: f32[1,32], index: 17, kind: input, shape index: {}]
  %s18 = inlined_call_operand.hbm [shape: f32[2,32,32], index: 18, kind: output, shape index: {0}]
  %s19 = inlined_call_operand.hbm [shape: bf16[2,4,32,32], index: 19, kind: output, shape index: {1}]
  %20 = xla_tuple %s18, %s19
  %s21 = sld [smem:[#allocation0]]
  $region189: #{tpu_custom_call.1} parent=0
    _
  %s23 = ssub.s32 1, %s21
  %s24 = scalar_select 0, %s23, %s21
  $region1: #{tpu_custom_call.1} parent=0
    #allocation4 [shape = 'u8[16384]{0}', space=vmem, size = 0x4000, scoped, tag = 'input window, operand 0']
    #allocation5 [shape = 's32[2]{0}', space=sflag, size = 0x8, scoped, tag = 'scoped memory for tpu_custom_call.1']
    #allocation6 [shape = 's32[2]{0}', space=sflag, size = 0x8, scoped, tag = 'scoped memory for tpu_custom_call.1']
    #allocation7 [shape = 'u8[16384]{0}', space=vmem, size = 0x4000, scoped, tag = 'input window, operand 1']
    #allocation8 [shape = 's32[2]{0}', space=sflag, size = 0x8, scoped, tag = 'scoped memory for tpu_custom_call.1']
    #allocation9 [shape = 'u8[8192]{0}', space=vmem, size = 0x2000, scoped, tag = 'input window, operand 2, single buffered']
    #allocation10 [shape = 'u8[512]{0}', space=vmem, size = 0x400, scoped, tag = 'input window, operand 3, single buffered']
    #allocation11 [shape = 's32[1]{0}', space=sflag, size = 0x4, scoped, tag = 'scoped memory for tpu_custom_call.1']
    #allocation12 [shape = 'u8[8192]{0}', space=vmem, size = 0x2000, scoped, tag = 'input window, operand 4, single buffered']
    #allocation13 [shape = 'u8[512]{0}', space=vmem, size = 0x400, scoped, tag = 'input window, operand 5, single buffered']
    #allocation14 [shape = 's32[1]{0}', space=sflag, size = 0x4, scoped, tag = 'scoped memory for tpu_custom_call.1']
    #allocation15 [shape = 'u8[8192]{0}', space=vmem, size = 0x2000, scoped, tag = 'input window, operand 6, single buffered']
    #allocation16 [shape = 'u8[512]{0}', space=vmem, size = 0x400, scoped, tag = 'input window, operand 7, single buffered']
    #allocation17 [shape = 's32[1]{0}', space=sflag, size = 0x4, scoped, tag = 'scoped memory for tpu_custom_call.1']
    #allocation18 [shape = 'u8[16384]{0}', space=vmem, size = 0x4000, scoped, tag = 'input window, operand 8, single buffered']
    #allocation19 [shape = 'u8[512]{0}', space=vmem, size = 0x400, scoped, tag = 'input window, operand 9, single buffered']
    #allocation20 [shape = 's32[1]{0}', space=sflag, size = 0x4, scoped, tag = 'scoped memory for tpu_custom_call.1']
    #allocation21 [shape = 'u8[512]{0}', space=vmem, size = 0x400, scoped, tag = 'input window, operand 10, single buffered']
    #allocation22 [shape = 'u8[512]{0}', space=vmem, size = 0x400, scoped, tag = 'input window, operand 11, single buffered']
    #allocation23 [shape = 's32[1]{0}', space=sflag, size = 0x4, scoped, tag = 'scoped memory for tpu_custom_call.1']
    #allocation24 [shape = 'u8[8192]{0}', space=vmem, size = 0x2000, scoped, tag = 'input window, operand 12, single buffered']
    #allocation25 [shape = 'u8[512]{0}', space=vmem, size = 0x400, scoped, tag = 'input window, operand 13, single buffered']
    #allocation26 [shape = 's32[1]{0}', space=sflag, size = 0x4, scoped, tag = 'scoped memory for tpu_custom_call.1']
    #allocation27 [shape = 'u8[16384]{0}', space=vmem, size = 0x4000, scoped, tag = 'input window, operand 14, single buffered']
    #allocation28 [shape = 'u8[512]{0}', space=vmem, size = 0x400, scoped, tag = 'input window, operand 15, single buffered']
    #allocation29 [shape = 's32[1]{0}', space=sflag, size = 0x4, scoped, tag = 'scoped memory for tpu_custom_call.1']
    #allocation30 [shape = 'u8[512]{0}', space=vmem, size = 0x400, scoped, tag = 'input window, operand 16, single buffered']
    #allocation31 [shape = 'u8[512]{0}', space=vmem, size = 0x400, scoped, tag = 'input window, operand 17, single buffered']
    #allocation32 [shape = 's32[1]{0}', space=sflag, size = 0x4, scoped, tag = 'scoped memory for tpu_custom_call.1']
    #allocation33 [shape = 'u8[16384]{0}', space=vmem, size = 0x4000, scoped, tag = 'output window, operand 0']
    #allocation34 [shape = 'u8[32768]{0}', space=vmem, size = 0x8000, scoped, tag = 'output window, operand 1']
    #allocation35 [shape = 's32[2]{0}', space=sflag, size = 0x8, scoped, tag = 'scoped memory for tpu_custom_call.1']
    %25 = vsyncpa [#allocation5], 0
    %s26 = scalar_lea.sflag [#allocation5], 1
    %27 = vsyncpa %s26, 0
    %28 = vsyncpa [#allocation8], 0
    %s29 = scalar_lea.sflag [#allocation8], 1
    %30 = vsyncpa %s29, 0
    %31 = vsyncpa [#allocation11], 0
    %32 = vsyncpa [#allocation14], 0
    %33 = vsyncpa [#allocation17], 0
    %34 = vsyncpa [#allocation20], 0
    %35 = vsyncpa [#allocation23], 0
    %36 = vsyncpa [#allocation26], 0
    %37 = vsyncpa [#allocation29], 0
    %38 = vsyncpa [#allocation32], 0
    %39 = vsyncpa [#allocation6], 0
    %s40 = scalar_lea.sflag [#allocation6], 1
    %41 = vsyncpa %s40, 0
    %42 = vsyncpa [#allocation35], 0
    %s43 = scalar_lea.sflag [#allocation35], 1
    %44 = vsyncpa %s43, 0
    loop: start=0, step=1, limit=6
    $region2: #{tpu_custom_call.1} parent=1 // loop_pre_header
      _
    $region3: #{tpu_custom_call.1} parent=1 // loop_header
      %s46 = sphi 0, %s50
      %p47 = scmp.ge.s32.totalorder %s46, 6
      %s53 = sphi 0, %s65
      %s54 = sphi 0, %s61
      %s55 = sphi 0, %s53
      %s56 = sphi 0, %s54
      %s57 = sphi 0, %s55
      %s58 = sphi 0, %s56
      %s68 = sphi 0, %s70
      %s71 = sphi 0, %s68
      %s72 = sphi 0, %s71
      %s88 = sphi 0, %s72
      %s96 = sphi 0, %s98
      %s99 = sphi 0, %s96
      %s100 = sphi 0, %s99
      %s116 = sphi 0, %s100
      %s120 = sphi 0, %s120
      %s122 = sphi 0, %s120
      %s123 = sphi 0, %s122
      %s137 = sphi 0, %s123
      %s141 = sphi 0, %s141
      %s143 = sphi 0, %s141
      %s144 = sphi 0, %s143
      %s158 = sphi 0, %s144
      %s162 = sphi 0, %s162
      %s164 = sphi 0, %s162
      %s165 = sphi 0, %s164
      %s179 = sphi 0, %s165
      %s183 = sphi 0, %s183
      %s185 = sphi 0, %s183
      %s186 = sphi 0, %s185
      %s200 = sphi 0, %s186
      %s204 = sphi 0, %s204
      %s206 = sphi 0, %s204
      %s207 = sphi 0, %s206
      %s221 = sphi 0, %s207
      %s225 = sphi 0, %s225
      %s227 = sphi 0, %s225
      %s228 = sphi 0, %s227
      %s242 = sphi 0, %s228
      %s246 = sphi 0, %s246
      %s248 = sphi 0, %s246
      %s249 = sphi 0, %s248
      %s263 = sphi 0, %s249
      %s267 = sphi 0, %s267
      %s269 = sphi 0, %s267
      %s270 = sphi 0, %s269
      %s284 = sphi 0, %s270
      %s288 = sphi 0, %s288
      %s290 = sphi 0, %s288
      %s291 = sphi 0, %s290
      %s305 = sphi 0, %s291
      %s309 = sphi 0, %s309
      %s311 = sphi 0, %s309
      %s312 = sphi 0, %s311
      %s326 = sphi 0, %s312
      %s330 = sphi 0, %s330
      %s332 = sphi 0, %s330
      %s333 = sphi 0, %s332
      %s347 = sphi 0, %s333
      %s351 = sphi 0, %s351
      %s353 = sphi 0, %s351
      %s354 = sphi 0, %s353
      %s368 = sphi 0, %s354
      %s372 = sphi 0, %s372
      %s374 = sphi 0, %s372
      %s375 = sphi 0, %s374
      %s389 = sphi 0, %s375
      %s393 = sphi 0, %s393
      %s395 = sphi 0, %s393
      %s396 = sphi 0, %s395
      %s410 = sphi 0, %s396
      %s414 = sphi 0, %s414
      %s416 = sphi 0, %s414
      %s417 = sphi 0, %s416
      %s431 = sphi 0, %s417
      %s435 = sphi 0, %s435
      %s437 = sphi 0, %s435
      %s438 = sphi 0, %s437
      %s452 = sphi 0, %s438
      %s460 = sphi 0, %s462
      %s463 = sphi 0, %s460
      %s464 = sphi 0, %s463
      %s480 = sphi 0, %s464
      %s488 = sphi 0, %s490
      %s491 = sphi 0, %s488
      %s492 = sphi 0, %s491
      %s508 = sphi 0, %s492
    $region4: #{tpu_custom_call.1} parent=1 // loop_header_branch
      %49 = sbr.rel (%p47) target = $region8
    $region5: #{tpu_custom_call.1} parent=1 // loop_body
      %s51 = ssub.s32 %s46, 1
      %s52 = ssub.s32 %s46, 2
      %s59 = sadd.s32 1, %s54
      %p60 = scmp.ge.s32.totalorder %s59, 2
      %s61 = scalar_select %p60, 0, %s59
      %s62 = sadd.s32 1, %s53
      %s63 = scalar_select %p60, %s62, %s53
      %p64 = scmp.ge.s32.totalorder %s63, 2
      %s65 = scalar_select %p64, 0, %s63
      %s66 = ssub.s32 %s53, %s65
      %p67 = scmp.eq.s32.totalorder %s66, 0
      %s69 = sadd.s32 %s68, 1
      %s70 = scalar_select %p67, %s68, %s69
      %p73 = pneg %p67
      %p74 = scmp.eq.s32.totalorder %s46, 3
      %p75 = por %p73, %p74
      %p76 = scmp.ne.s32.totalorder %s68, %s71
      %p77 = scmp.eq.s32.totalorder %s46, 0
      %p78 = por %p76, %p77
      %p79 = scmp.ne.s32.totalorder %s68, %s71
      %p80 = scmp.eq.s32.totalorder %s51, 3
      %p81 = por %p79, %p80
      %p82 = scmp.ne.s32.totalorder %s71, %s72
      %p83 = scmp.eq.s32.totalorder %s51, 0
      %p84 = por %p82, %p83
      %p85 = scmp.ne.s32.totalorder %s71, %s72
      %p86 = scmp.eq.s32.totalorder %s52, 3
      %p87 = por %p85, %p86
      %p89 = scmp.ne.s32.totalorder %s72, %s88
      %p90 = scmp.eq.s32.totalorder %s52, 0
      %p91 = por %p89, %p90
      %s92 = ssub.s32 %s53, %s65
      %s93 = ssub.s32 %s54, %s61
      %s94 = sor.u32 %s92, %s93
      %p95 = scmp.eq.s32.totalorder %s94, 0
      %s97 = sadd.s32 %s96, 1
      %s98 = scalar_select %p95, %s96, %s97
      %p101 = pneg %p95
      %p102 = scmp.eq.s32.totalorder %s46, 3
      %p103 = por %p101, %p102
      %p104 = scmp.ne.s32.totalorder %s96, %s99
      %p105 = scmp.eq.s32.totalorder %s46, 0
      %p106 = por %p104, %p105
      %p107 = scmp.ne.s32.totalorder %s96, %s99
      %p108 = scmp.eq.s32.totalorder %s51, 3
      %p109 = por %p107, %p108
      %p110 = scmp.ne.s32.totalorder %s99, %s100
      %p111 = scmp.eq.s32.totalorder %s51, 0
      %p112 = por %p110, %p111
      %p113 = scmp.ne.s32.totalorder %s99, %s100
      %p114 = scmp.eq.s32.totalorder %s52, 3
      %p115 = por %p113, %p114
      %p117 = scmp.ne.s32.totalorder %s100, %s116
      %p118 = scmp.eq.s32.totalorder %s52, 0
      %p119 = por %p117, %p118
      %s121 = sadd.s32 %s120, 1
      %p124 = scmp.eq.s32.totalorder %s46, 3
      %p125 = scmp.ne.s32.totalorder %s120, %s122
      %p126 = scmp.eq.s32.totalorder %s46, 0
      %p127 = por %p125, %p126
      %p128 = scmp.ne.s32.totalorder %s120, %s122
      %p129 = scmp.eq.s32.totalorder %s51, 3
      %p130 = por %p128, %p129
      %p131 = scmp.ne.s32.totalorder %s122, %s123
      %p132 = scmp.eq.s32.totalorder %s51, 0
      %p133 = por %p131, %p132
      %p134 = scmp.ne.s32.totalorder %s122, %s123
      %p135 = scmp.eq.s32.totalorder %s52, 3
      %p136 = por %p134, %p135
      %p138 = scmp.ne.s32.totalorder %s123, %s137
      %p139 = scmp.eq.s32.totalorder %s52, 0
      %p140 = por %p138, %p139
      %s142 = sadd.s32 %s141, 1
      %p145 = scmp.eq.s32.totalorder %s46, 3
      %p146 = scmp.ne.s32.totalorder %s141, %s143
      %p147 = scmp.eq.s32.totalorder %s46, 0
      %p148 = por %p146, %p147
      %p149 = scmp.ne.s32.totalorder %s141, %s143
      %p150 = scmp.eq.s32.totalorder %s51, 3
      %p151 = por %p149, %p150
      %p152 = scmp.ne.s32.totalorder %s143, %s144
      %p153 = scmp.eq.s32.totalorder %s51, 0
      %p154 = por %p152, %p153
      %p155 = scmp.ne.s32.totalorder %s143, %s144
      %p156 = scmp.eq.s32.totalorder %s52, 3
      %p157 = por %p155, %p156
      %p159 = scmp.ne.s32.totalorder %s144, %s158
      %p160 = scmp.eq.s32.totalorder %s52, 0
      %p161 = por %p159, %p160
      %s163 = sadd.s32 %s162, 1
      %p166 = scmp.eq.s32.totalorder %s46, 3
      %p167 = scmp.ne.s32.totalorder %s162, %s164
      %p168 = scmp.eq.s32.totalorder %s46, 0
      %p169 = por %p167, %p168
      %p170 = scmp.ne.s32.totalorder %s162, %s164
      %p171 = scmp.eq.s32.totalorder %s51, 3
      %p172 = por %p170, %p171
      %p173 = scmp.ne.s32.totalorder %s164, %s165
      %p174 = scmp.eq.s32.totalorder %s51, 0
      %p175 = por %p173, %p174
      %p176 = scmp.ne.s32.totalorder %s164, %s165
      %p177 = scmp.eq.s32.totalorder %s52, 3
      %p178 = por %p176, %p177
      %p180 = scmp.ne.s32.totalorder %s165, %s179
      %p181 = scmp.eq.s32.totalorder %s52, 0
      %p182 = por %p180, %p181
      %s184 = sadd.s32 %s183, 1
      %p187 = scmp.eq.s32.totalorder %s46, 3
      %p188 = scmp.ne.s32.totalorder %s183, %s185
      %p189 = scmp.eq.s32.totalorder %s46, 0
      %p190 = por %p188, %p189
      %p191 = scmp.ne.s32.totalorder %s183, %s185
      %p192 = scmp.eq.s32.totalorder %s51, 3
      %p193 = por %p191, %p192
      %p194 = scmp.ne.s32.totalorder %s185, %s186
      %p195 = scmp.eq.s32.totalorder %s51, 0
      %p196 = por %p194, %p195
      %p197 = scmp.ne.s32.totalorder %s185, %s186
      %p198 = scmp.eq.s32.totalorder %s52, 3
      %p199 = por %p197, %p198
      %p201 = scmp.ne.s32.totalorder %s186, %s200
      %p202 = scmp.eq.s32.totalorder %s52, 0
      %p203 = por %p201, %p202
      %s205 = sadd.s32 %s204, 1
      %p208 = scmp.eq.s32.totalorder %s46, 3
      %p209 = scmp.ne.s32.totalorder %s204, %s206
      %p210 = scmp.eq.s32.totalorder %s46, 0
      %p211 = por %p209, %p210
      %p212 = scmp.ne.s32.totalorder %s204, %s206
      %p213 = scmp.eq.s32.totalorder %s51, 3
      %p214 = por %p212, %p213
      %p215 = scmp.ne.s32.totalorder %s206, %s207
      %p216 = scmp.eq.s32.totalorder %s51, 0
      %p217 = por %p215, %p216
      %p218 = scmp.ne.s32.totalorder %s206, %s207
      %p219 = scmp.eq.s32.totalorder %s52, 3
      %p220 = por %p218, %p219
      %p222 = scmp.ne.s32.totalorder %s207, %s221
      %p223 = scmp.eq.s32.totalorder %s52, 0
      %p224 = por %p222, %p223
      %s226 = sadd.s32 %s225, 1
      %p229 = scmp.eq.s32.totalorder %s46, 3
      %p230 = scmp.ne.s32.totalorder %s225, %s227
      %p231 = scmp.eq.s32.totalorder %s46, 0
      %p232 = por %p230, %p231
      %p233 = scmp.ne.s32.totalorder %s225, %s227
      %p234 = scmp.eq.s32.totalorder %s51, 3
      %p235 = por %p233, %p234
      %p236 = scmp.ne.s32.totalorder %s227, %s228
      %p237 = scmp.eq.s32.totalorder %s51, 0
      %p238 = por %p236, %p237
      %p239 = scmp.ne.s32.totalorder %s227, %s228
      %p240 = scmp.eq.s32.totalorder %s52, 3
      %p241 = por %p239, %p240
      %p243 = scmp.ne.s32.totalorder %s228, %s242
      %p244 = scmp.eq.s32.totalorder %s52, 0
      %p245 = por %p243, %p244
      %s247 = sadd.s32 %s246, 1
      %p250 = scmp.eq.s32.totalorder %s46, 3
      %p251 = scmp.ne.s32.totalorder %s246, %s248
      %p252 = scmp.eq.s32.totalorder %s46, 0
      %p253 = por %p251, %p252
      %p254 = scmp.ne.s32.totalorder %s246, %s248
      %p255 = scmp.eq.s32.totalorder %s51, 3
      %p256 = por %p254, %p255
      %p257 = scmp.ne.s32.totalorder %s248, %s249
      %p258 = scmp.eq.s32.totalorder %s51, 0
      %p259 = por %p257, %p258
      %p260 = scmp.ne.s32.totalorder %s248, %s249
      %p261 = scmp.eq.s32.totalorder %s52, 3
      %p262 = por %p260, %p261
      %p264 = scmp.ne.s32.totalorder %s249, %s263
      %p265 = scmp.eq.s32.totalorder %s52, 0
      %p266 = por %p264, %p265
      %s268 = sadd.s32 %s267, 1
      %p271 = scmp.eq.s32.totalorder %s46, 3
      %p272 = scmp.ne.s32.totalorder %s267, %s269
      %p273 = scmp.eq.s32.totalorder %s46, 0
      %p274 = por %p272, %p273
      %p275 = scmp.ne.s32.totalorder %s267, %s269
      %p276 = scmp.eq.s32.totalorder %s51, 3
      %p277 = por %p275, %p276
      %p278 = scmp.ne.s32.totalorder %s269, %s270
      %p279 = scmp.eq.s32.totalorder %s51, 0
      %p280 = por %p278, %p279
      %p281 = scmp.ne.s32.totalorder %s269, %s270
      %p282 = scmp.eq.s32.totalorder %s52, 3
      %p283 = por %p281, %p282
      %p285 = scmp.ne.s32.totalorder %s270, %s284
      %p286 = scmp.eq.s32.totalorder %s52, 0
      %p287 = por %p285, %p286
      %s289 = sadd.s32 %s288, 1
      %p292 = scmp.eq.s32.totalorder %s46, 3
      %p293 = scmp.ne.s32.totalorder %s288, %s290
      %p294 = scmp.eq.s32.totalorder %s46, 0
      %p295 = por %p293, %p294
      %p296 = scmp.ne.s32.totalorder %s288, %s290
      %p297 = scmp.eq.s32.totalorder %s51, 3
      %p298 = por %p296, %p297
      %p299 = scmp.ne.s32.totalorder %s290, %s291
      %p300 = scmp.eq.s32.totalorder %s51, 0
      %p301 = por %p299, %p300
      %p302 = scmp.ne.s32.totalorder %s290, %s291
      %p303 = scmp.eq.s32.totalorder %s52, 3
      %p304 = por %p302, %p303
      %p306 = scmp.ne.s32.totalorder %s291, %s305
      %p307 = scmp.eq.s32.totalorder %s52, 0
      %p308 = por %p306, %p307
      %s310 = sadd.s32 %s309, 1
      %p313 = scmp.eq.s32.totalorder %s46, 3
      %p314 = scmp.ne.s32.totalorder %s309, %s311
      %p315 = scmp.eq.s32.totalorder %s46, 0
      %p316 = por %p314, %p315
      %p317 = scmp.ne.s32.totalorder %s309, %s311
      %p318 = scmp.eq.s32.totalorder %s51, 3
      %p319 = por %p317, %p318
      %p320 = scmp.ne.s32.totalorder %s311, %s312
      %p321 = scmp.eq.s32.totalorder %s51, 0
      %p322 = por %p320, %p321
      %p323 = scmp.ne.s32.totalorder %s311, %s312
      %p324 = scmp.eq.s32.totalorder %s52, 3
      %p325 = por %p323, %p324
      %p327 = scmp.ne.s32.totalorder %s312, %s326
      %p328 = scmp.eq.s32.totalorder %s52, 0
      %p329 = por %p327, %p328
      %s331 = sadd.s32 %s330, 1
      %p334 = scmp.eq.s32.totalorder %s46, 3
      %p335 = scmp.ne.s32.totalorder %s330, %s332
      %p336 = scmp.eq.s32.totalorder %s46, 0
      %p337 = por %p335, %p336
      %p338 = scmp.ne.s32.totalorder %s330, %s332
      %p339 = scmp.eq.s32.totalorder %s51, 3
      %p340 = por %p338, %p339
      %p341 = scmp.ne.s32.totalorder %s332, %s333
      %p342 = scmp.eq.s32.totalorder %s51, 0
      %p343 = por %p341, %p342
      %p344 = scmp.ne.s32.totalorder %s332, %s333
      %p345 = scmp.eq.s32.totalorder %s52, 3
      %p346 = por %p344, %p345
      %p348 = scmp.ne.s32.totalorder %s333, %s347
      %p349 = scmp.eq.s32.totalorder %s52, 0
      %p350 = por %p348, %p349
      %s352 = sadd.s32 %s351, 1
      %p355 = scmp.eq.s32.totalorder %s46, 3
      %p356 = scmp.ne.s32.totalorder %s351, %s353
      %p357 = scmp.eq.s32.totalorder %s46, 0
      %p358 = por %p356, %p357
      %p359 = scmp.ne.s32.totalorder %s351, %s353
      %p360 = scmp.eq.s32.totalorder %s51, 3
      %p361 = por %p359, %p360
      %p362 = scmp.ne.s32.totalorder %s353, %s354
      %p363 = scmp.eq.s32.totalorder %s51, 0
      %p364 = por %p362, %p363
      %p365 = scmp.ne.s32.totalorder %s353, %s354
      %p366 = scmp.eq.s32.totalorder %s52, 3
      %p367 = por %p365, %p366
      %p369 = scmp.ne.s32.totalorder %s354, %s368
      %p370 = scmp.eq.s32.totalorder %s52, 0
      %p371 = por %p369, %p370
      %s373 = sadd.s32 %s372, 1
      %p376 = scmp.eq.s32.totalorder %s46, 3
      %p377 = scmp.ne.s32.totalorder %s372, %s374
      %p378 = scmp.eq.s32.totalorder %s46, 0
      %p379 = por %p377, %p378
      %p380 = scmp.ne.s32.totalorder %s372, %s374
      %p381 = scmp.eq.s32.totalorder %s51, 3
      %p382 = por %p380, %p381
      %p383 = scmp.ne.s32.totalorder %s374, %s375
      %p384 = scmp.eq.s32.totalorder %s51, 0
      %p385 = por %p383, %p384
      %p386 = scmp.ne.s32.totalorder %s374, %s375
      %p387 = scmp.eq.s32.totalorder %s52, 3
      %p388 = por %p386, %p387
      %p390 = scmp.ne.s32.totalorder %s375, %s389
      %p391 = scmp.eq.s32.totalorder %s52, 0
      %p392 = por %p390, %p391
      %s394 = sadd.s32 %s393, 1
      %p397 = scmp.eq.s32.totalorder %s46, 3
      %p398 = scmp.ne.s32.totalorder %s393, %s395
      %p399 = scmp.eq.s32.totalorder %s46, 0
      %p400 = por %p398, %p399
      %p401 = scmp.ne.s32.totalorder %s393, %s395
      %p402 = scmp.eq.s32.totalorder %s51, 3
      %p403 = por %p401, %p402
      %p404 = scmp.ne.s32.totalorder %s395, %s396
      %p405 = scmp.eq.s32.totalorder %s51, 0
      %p406 = por %p404, %p405
      %p407 = scmp.ne.s32.totalorder %s395, %s396
      %p408 = scmp.eq.s32.totalorder %s52, 3
      %p409 = por %p407, %p408
      %p411 = scmp.ne.s32.totalorder %s396, %s410
      %p412 = scmp.eq.s32.totalorder %s52, 0
      %p413 = por %p411, %p412
      %s415 = sadd.s32 %s414, 1
      %p418 = scmp.eq.s32.totalorder %s46, 3
      %p419 = scmp.ne.s32.totalorder %s414, %s416
      %p420 = scmp.eq.s32.totalorder %s46, 0
      %p421 = por %p419, %p420
      %p422 = scmp.ne.s32.totalorder %s414, %s416
      %p423 = scmp.eq.s32.totalorder %s51, 3
      %p424 = por %p422, %p423
      %p425 = scmp.ne.s32.totalorder %s416, %s417
      %p426 = scmp.eq.s32.totalorder %s51, 0
      %p427 = por %p425, %p426
      %p428 = scmp.ne.s32.totalorder %s416, %s417
      %p429 = scmp.eq.s32.totalorder %s52, 3
      %p430 = por %p428, %p429
      %p432 = scmp.ne.s32.totalorder %s417, %s431
      %p433 = scmp.eq.s32.totalorder %s52, 0
      %p434 = por %p432, %p433
      %s436 = sadd.s32 %s435, 1
      %p439 = scmp.eq.s32.totalorder %s46, 3
      %p440 = scmp.ne.s32.totalorder %s435, %s437
      %p441 = scmp.eq.s32.totalorder %s46, 0
      %p442 = por %p440, %p441
      %p443 = scmp.ne.s32.totalorder %s435, %s437
      %p444 = scmp.eq.s32.totalorder %s51, 3
      %p445 = por %p443, %p444
      %p446 = scmp.ne.s32.totalorder %s437, %s438
      %p447 = scmp.eq.s32.totalorder %s51, 0
      %p448 = por %p446, %p447
      %p449 = scmp.ne.s32.totalorder %s437, %s438
      %p450 = scmp.eq.s32.totalorder %s52, 3
      %p451 = por %p449, %p450
      %p453 = scmp.ne.s32.totalorder %s438, %s452
      %p454 = scmp.eq.s32.totalorder %s52, 0
      %p455 = por %p453, %p454
      %s456 = ssub.s32 %s53, %s65
      %s457 = ssub.s32 %s54, %s61
      %s458 = sor.u32 %s456, %s457
      %p459 = scmp.eq.s32.totalorder %s458, 0
      %s461 = sadd.s32 %s460, 1
      %s462 = scalar_select %p459, %s460, %s461
      %p465 = pneg %p459
      %p466 = scmp.eq.s32.totalorder %s46, 3
      %p467 = por %p465, %p466
      %p468 = scmp.ne.s32.totalorder %s460, %s463
      %p469 = scmp.eq.s32.totalorder %s46, 0
      %p470 = por %p468, %p469
      %p471 = scmp.ne.s32.totalorder %s460, %s463
      %p472 = scmp.eq.s32.totalorder %s51, 3
      %p473 = por %p471, %p472
      %p474 = scmp.ne.s32.totalorder %s463, %s464
      %p475 = scmp.eq.s32.totalorder %s51, 0
      %p476 = por %p474, %p475
      %p477 = scmp.ne.s32.totalorder %s463, %s464
      %p478 = scmp.eq.s32.totalorder %s52, 3
      %p479 = por %p477, %p478
      %p481 = scmp.ne.s32.totalorder %s464, %s480
      %p482 = scmp.eq.s32.totalorder %s52, 0
      %p483 = por %p481, %p482
      %s484 = ssub.s32 %s53, %s65
      %s485 = ssub.s32 %s54, %s61
      %s486 = sor.u32 %s484, %s485
      %p487 = scmp.eq.s32.totalorder %s486, 0
      %s489 = sadd.s32 %s488, 1
      %s490 = scalar_select %p487, %s488, %s489
      %p493 = pneg %p487
      %p494 = scmp.eq.s32.totalorder %s46, 3
      %p495 = por %p493, %p494
      %p496 = scmp.ne.s32.totalorder %s488, %s491
      %p497 = scmp.eq.s32.totalorder %s46, 0
      %p498 = por %p496, %p497
      %p499 = scmp.ne.s32.totalorder %s488, %s491
      %p500 = scmp.eq.s32.totalorder %s51, 3
      %p501 = por %p499, %p500
      %p502 = scmp.ne.s32.totalorder %s491, %s492
      %p503 = scmp.eq.s32.totalorder %s51, 0
      %p504 = por %p502, %p503
      %p505 = scmp.ne.s32.totalorder %s491, %s492
      %p506 = scmp.eq.s32.totalorder %s52, 3
      %p507 = por %p505, %p506
      %p509 = scmp.ne.s32.totalorder %s492, %s508
      %p510 = scmp.eq.s32.totalorder %s52, 0
      %p511 = por %p509, %p510
      %p512 = scmp.le.s32.totalorder 1, %s46
      %p513 = scmp.lt.s32.totalorder %s46, 5
      %p514 = pnand %p512, %p513
      %p515 = pneg %p514
      // Predicated region
      $region9: #{tpu_custom_call.1} parent=5 // pred_check
        _
      $region10: #{tpu_custom_call.1} parent=5 // pred_check_branch
        %517 = sbr.rel (%p514) target = $region12
      $region11: #{tpu_custom_call.1} parent=5 // pred_region
        %s518 = ssub.s32 %s46, 1
        // Predicated region
        $region13: #{tpu_custom_call.1} parent=11 // pred_check
          %p519 = pneg %p133
        $region14: #{tpu_custom_call.1} parent=11 // pred_check_branch
          %521 = sbr.rel (%p519) target = $region16
        $region15: #{tpu_custom_call.1} parent=11 // pred_region
          %s523 = ssub.s32 256, 256
          %524 = vsyncadd [#allocation8], %s523
          %s525 = sshll.u32 [#allocation9], 4
          %s526 = int_to_ptr.vmem [resolvable:$true] %s525
          %531 = dma.hbm_to_vmem [thread:$0]  %s2, 256, %s526, [#allocation8], 64, 64, 4
        $region16: #{tpu_custom_call.1} parent=11 // pred_fallthru
          _
        // Predicated region
        $region17: #{tpu_custom_call.1} parent=11 // pred_check
          %p532 = pneg %p154
        $region18: #{tpu_custom_call.1} parent=11 // pred_check_branch
          %534 = sbr.rel (%p532) target = $region20
        $region19: #{tpu_custom_call.1} parent=11 // pred_region
          %s536 = ssub.s32 16, 16
          %537 = vsyncadd [#allocation11], %s536
          %s539 = sshll.u32 [#allocation10], 4
          %s540 = int_to_ptr.vmem [resolvable:$true] %s539
          %542 = dma.hbm_to_vmem [thread:$0]  %s3, 16, %s540, [#allocation11]
        $region20: #{tpu_custom_call.1} parent=11 // pred_fallthru
          _
        // Predicated region
        $region21: #{tpu_custom_call.1} parent=11 // pred_check
          %p543 = pneg %p175
        $region22: #{tpu_custom_call.1} parent=11 // pred_check_branch
          %545 = sbr.rel (%p543) target = $region24
        $region23: #{tpu_custom_call.1} parent=11 // pred_region
          %s547 = ssub.s32 256, 256
          %548 = vsyncadd [#allocation11], %s547
          %s549 = sshll.u32 [#allocation12], 4
          %s550 = int_to_ptr.vmem [resolvable:$true] %s549
          %555 = dma.hbm_to_vmem [thread:$0]  %s4, 256, %s550, [#allocation11], 64, 64, 4
        $region24: #{tpu_custom_call.1} parent=11 // pred_fallthru
          _
        // Predicated region
        $region25: #{tpu_custom_call.1} parent=11 // pred_check
          %p556 = pneg %p196
        $region26: #{tpu_custom_call.1} parent=11 // pred_check_branch
          %558 = sbr.rel (%p556) target = $region28
        $region27: #{tpu_custom_call.1} parent=11 // pred_region
          %s560 = ssub.s32 16, 16
          %561 = vsyncadd [#allocation14], %s560
          %s563 = sshll.u32 [#allocation13], 4
          %s564 = int_to_ptr.vmem [resolvable:$true] %s563
          %566 = dma.hbm_to_vmem [thread:$0]  %s5, 16, %s564, [#allocation14]
        $region28: #{tpu_custom_call.1} parent=11 // pred_fallthru
          _
        // Predicated region
        $region29: #{tpu_custom_call.1} parent=11 // pred_check
          %p567 = pneg %p217
        $region30: #{tpu_custom_call.1} parent=11 // pred_check_branch
          %569 = sbr.rel (%p567) target = $region32
        $region31: #{tpu_custom_call.1} parent=11 // pred_region
          %s571 = ssub.s32 256, 256
          %572 = vsyncadd [#allocation14], %s571
          %s573 = sshll.u32 [#allocation15], 4
          %s574 = int_to_ptr.vmem [resolvable:$true] %s573
          %579 = dma.hbm_to_vmem [thread:$0]  %s6, 256, %s574, [#allocation14], 64, 64, 4
        $region32: #{tpu_custom_call.1} parent=11 // pred_fallthru
          _
        // Predicated region
        $region33: #{tpu_custom_call.1} parent=11 // pred_check
          %p580 = pneg %p238
        $region34: #{tpu_custom_call.1} parent=11 // pred_check_branch
          %582 = sbr.rel (%p580) target = $region36
        $region35: #{tpu_custom_call.1} parent=11 // pred_region
          %s584 = ssub.s32 16, 16
          %585 = vsyncadd [#allocation17], %s584
          %s587 = sshll.u32 [#allocation16], 4
          %s588 = int_to_ptr.vmem [resolvable:$true] %s587
          %590 = dma.hbm_to_vmem [thread:$0]  %s7, 16, %s588, [#allocation17]
        $region36: #{tpu_custom_call.1} parent=11 // pred_fallthru
          _
        // Predicated region
        $region37: #{tpu_custom_call.1} parent=11 // pred_check
          %p591 = pneg %p259
        $region38: #{tpu_custom_call.1} parent=11 // pred_check_branch
          %593 = sbr.rel (%p591) target = $region40
        $region39: #{tpu_custom_call.1} parent=11 // pred_region
          %s595 = ssub.s32 512, 512
          %596 = vsyncadd [#allocation17], %s595
          %s597 = sshll.u32 [#allocation18], 4
          %s598 = int_to_ptr.vmem [resolvable:$true] %s597
          %603 = dma.hbm_to_vmem [thread:$0]  %s8, 512, %s598, [#allocation17], 64, 64, 4
        $region40: #{tpu_custom_call.1} parent=11 // pred_fallthru
          _
        // Predicated region
        $region41: #{tpu_custom_call.1} parent=11 // pred_check
          %p604 = pneg %p280
        $region42: #{tpu_custom_call.1} parent=11 // pred_check_branch
          %606 = sbr.rel (%p604) target = $region44
        $region43: #{tpu_custom_call.1} parent=11 // pred_region
          %s608 = ssub.s32 16, 16
          %609 = vsyncadd [#allocation20], %s608
          %s611 = sshll.u32 [#allocation19], 4
          %s612 = int_to_ptr.vmem [resolvable:$true] %s611
          %614 = dma.hbm_to_vmem [thread:$0]  %s9, 16, %s612, [#allocation20]
        $region44: #{tpu_custom_call.1} parent=11 // pred_fallthru
          _
        // Predicated region
        $region45: #{tpu_custom_call.1} parent=11 // pred_check
          %p615 = pneg %p301
        $region46: #{tpu_custom_call.1} parent=11 // pred_check_branch
          %617 = sbr.rel (%p615) target = $region48
        $region47: #{tpu_custom_call.1} parent=11 // pred_region
          %s619 = ssub.s32 16, 16
          %620 = vsyncadd [#allocation20], %s619
          %s622 = sshll.u32 [#allocation21], 4
          %s623 = int_to_ptr.vmem [resolvable:$true] %s622
          %625 = dma.hbm_to_vmem [thread:$0]  %s10, 16, %s623, [#allocation20]
        $region48: #{tpu_custom_call.1} parent=11 // pred_fallthru
          _
        // Predicated region
        $region49: #{tpu_custom_call.1} parent=11 // pred_check
          %p626 = pneg %p322
        $region50: #{tpu_custom_call.1} parent=11 // pred_check_branch
          %628 = sbr.rel (%p626) target = $region52
        $region51: #{tpu_custom_call.1} parent=11 // pred_region
          %s630 = ssub.s32 16, 16
          %631 = vsyncadd [#allocation23], %s630
          %s633 = sshll.u32 [#allocation22], 4
          %s634 = int_to_ptr.vmem [resolvable:$true] %s633
          %636 = dma.hbm_to_vmem [thread:$0]  %s11, 16, %s634, [#allocation23]
        $region52: #{tpu_custom_call.1} parent=11 // pred_fallthru
          _
        // Predicated region
        $region53: #{tpu_custom_call.1} parent=11 // pred_check
          %p637 = pneg %p343
        $region54: #{tpu_custom_call.1} parent=11 // pred_check_branch
          %639 = sbr.rel (%p637) target = $region56
        $region55: #{tpu_custom_call.1} parent=11 // pred_region
          %s641 = ssub.s32 256, 256
          %642 = vsyncadd [#allocation23], %s641
          %s643 = sshll.u32 [#allocation24], 4
          %s644 = int_to_ptr.vmem [resolvable:$true] %s643
          %649 = dma.hbm_to_vmem [thread:$0]  %s12, 256, %s644, [#allocation23], 64, 64, 4
        $region56: #{tpu_custom_call.1} parent=11 // pred_fallthru
          _
        // Predicated region
        $region57: #{tpu_custom_call.1} parent=11 // pred_check
          %p650 = pneg %p364
        $region58: #{tpu_custom_call.1} parent=11 // pred_check_branch
          %652 = sbr.rel (%p650) target = $region60
        $region59: #{tpu_custom_call.1} parent=11 // pred_region
          %s654 = ssub.s32 16, 16
          %655 = vsyncadd [#allocation26], %s654
          %s657 = sshll.u32 [#allocation25], 4
          %s658 = int_to_ptr.vmem [resolvable:$true] %s657
          %660 = dma.hbm_to_vmem [thread:$0]  %s13, 16, %s658, [#allocation26]
        $region60: #{tpu_custom_call.1} parent=11 // pred_fallthru
          _
        // Predicated region
        $region61: #{tpu_custom_call.1} parent=11 // pred_check
          %p661 = pneg %p385
        $region62: #{tpu_custom_call.1} parent=11 // pred_check_branch
          %663 = sbr.rel (%p661) target = $region64
        $region63: #{tpu_custom_call.1} parent=11 // pred_region
          %s665 = ssub.s32 512, 512
          %666 = vsyncadd [#allocation26], %s665
          %s667 = sshll.u32 [#allocation27], 4
          %s668 = int_to_ptr.vmem [resolvable:$true] %s667
          %673 = dma.hbm_to_vmem [thread:$0]  %s14, 512, %s668, [#allocation26], 64, 64, 4
        $region64: #{tpu_custom_call.1} parent=11 // pred_fallthru
          _
        // Predicated region
        $region65: #{tpu_custom_call.1} parent=11 // pred_check
          %p674 = pneg %p406
        $region66: #{tpu_custom_call.1} parent=11 // pred_check_branch
          %676 = sbr.rel (%p674) target = $region68
        $region67: #{tpu_custom_call.1} parent=11 // pred_region
          %s678 = ssub.s32 16, 16
          %679 = vsyncadd [#allocation29], %s678
          %s681 = sshll.u32 [#allocation28], 4
          %s682 = int_to_ptr.vmem [resolvable:$true] %s681
          %684 = dma.hbm_to_vmem [thread:$0]  %s15, 16, %s682, [#allocation29]
        $region68: #{tpu_custom_call.1} parent=11 // pred_fallthru
          _
        // Predicated region
        $region69: #{tpu_custom_call.1} parent=11 // pred_check
          %p685 = pneg %p427
        $region70: #{tpu_custom_call.1} parent=11 // pred_check_branch
          %687 = sbr.rel (%p685) target = $region72
        $region71: #{tpu_custom_call.1} parent=11 // pred_region
          %s689 = ssub.s32 16, 16
          %690 = vsyncadd [#allocation29], %s689
          %s692 = sshll.u32 [#allocation30], 4
          %s693 = int_to_ptr.vmem [resolvable:$true] %s692
          %695 = dma.hbm_to_vmem [thread:$0]  %s16, 16, %s693, [#allocation29]
        $region72: #{tpu_custom_call.1} parent=11 // pred_fallthru
          _
        // Predicated region
        $region73: #{tpu_custom_call.1} parent=11 // pred_check
          %p696 = pneg %p448
        $region74: #{tpu_custom_call.1} parent=11 // pred_check_branch
          %698 = sbr.rel (%p696) target = $region76
        $region75: #{tpu_custom_call.1} parent=11 // pred_region
          %s700 = ssub.s32 16, 16
          %701 = vsyncadd [#allocation32], %s700
          %s703 = sshll.u32 [#allocation31], 4
          %s704 = int_to_ptr.vmem [resolvable:$true] %s703
          %706 = dma.hbm_to_vmem [thread:$0]  %s17, 16, %s704, [#allocation32]
        $region76: #{tpu_custom_call.1} parent=11 // pred_fallthru
          _
      $region12: #{tpu_custom_call.1} parent=5 // pred_fallthru
        _
      %p707 = scmp.lt.s32.totalorder %s46, 4
      // Predicated region
      $region77: #{tpu_custom_call.1} parent=5 // pred_check
        %p708 = pneg %p707
      $region78: #{tpu_custom_call.1} parent=5 // pred_check_branch
        %710 = sbr.rel (%p708) target = $region80
      $region79: #{tpu_custom_call.1} parent=5 // pred_region
        // Predicated region
        $region81: #{tpu_custom_call.1} parent=79 // pred_check
          %p711 = pneg %p78
        $region82: #{tpu_custom_call.1} parent=79 // pred_check_branch
          %713 = sbr.rel (%p711) target = $region84
        $region83: #{tpu_custom_call.1} parent=79 // pred_region
          %s714 = sand.u32 %s68, 1
          %s715 = scalar_lea.sflag [#allocation5], %s714
          %s716 = sand.u32 %s68, 1
          %s717 = smul.addr %s716, 16
          %s718 = scalar_lea.vmem [#allocation4], %s717
          %s720 = ssub.s32 256, 256
          %721 = vsyncadd %s715, %s720
          %s722 = smul.addr %s53, 4
          %s723 = smul.addr %s722, 64
          %s724 = scalar_lea.hbm %s0, %s723
          %s725 = sshll.u32 %s718, 4
          %s726 = int_to_ptr.vmem [resolvable:$true] %s725
          %731 = dma.hbm_to_vmem [thread:$0]  %s724, 256, %s726, %s715, 64, 64, 4
        $region84: #{tpu_custom_call.1} parent=79 // pred_fallthru
          _
        // Predicated region
        $region85: #{tpu_custom_call.1} parent=79 // pred_check
          %p732 = pneg %p106
        $region86: #{tpu_custom_call.1} parent=79 // pred_check_branch
          %734 = sbr.rel (%p732) target = $region88
        $region87: #{tpu_custom_call.1} parent=79 // pred_region
          %s735 = sand.u32 %s46, 1
          %s736 = scalar_lea.sflag [#allocation8], %s735
          %s737 = sand.u32 %s96, 1
          %s738 = smul.addr %s737, 16
          %s739 = scalar_lea.vmem [#allocation7], %s738
          %s740 = smul.u32 2, %s54
          %s742 = ssub.s32 256, 256
          %743 = vsyncadd %s736, %s742
          %s744 = smul.addr %s53, 4
          %s745 = sadd.s32 %s740, %s744
          %s746 = smul.addr %s745, 128
          %s747 = scalar_lea.hbm %s1, %s746
          %s748 = sshll.u32 %s739, 4
          %s749 = int_to_ptr.vmem [resolvable:$true] %s748
          %754 = dma.hbm_to_vmem [thread:$0]  %s747, 256, %s749, %s736, 128, 128, 8
        $region88: #{tpu_custom_call.1} parent=79 // pred_fallthru
          _
      $region80: #{tpu_custom_call.1} parent=5 // pred_fallthru
        _
      %p755 = scmp.le.s32.totalorder 1, %s46
      %p756 = scmp.lt.s32.totalorder %s46, 5
      %p757 = pnand %p755, %p756
      %p758 = pneg %p757
      // Predicated region
      $region89: #{tpu_custom_call.1} parent=5 // pred_check
        _
      $region90: #{tpu_custom_call.1} parent=5 // pred_check_branch
        %760 = sbr.rel (%p757) target = $region92
      $region91: #{tpu_custom_call.1} parent=5 // pred_region
        %s761 = ssub.s32 %s46, 1
        %s762 = sand.u32 %s71, 1
        %s763 = scalar_lea.sflag [#allocation5], %s762
        %s764 = sand.u32 %s71, 1
        %s765 = smul.addr %s764, 16
        %s766 = scalar_lea.vmem [#allocation4], %s765
        // Predicated region
        $region93: #{tpu_custom_call.1} parent=91 // pred_check
          %p767 = pneg %p84
        $region94: #{tpu_custom_call.1} parent=91 // pred_check_branch
          %769 = sbr.rel (%p767) target = $region96
        $region95: #{tpu_custom_call.1} parent=91 // pred_region
          %770 = dma.done %s763, 256
        $region96: #{tpu_custom_call.1} parent=91 // pred_fallthru
          _
        %s771 = sand.u32 %s51, 1
        %s772 = scalar_lea.sflag [#allocation8], %s771
        %s773 = sand.u32 %s99, 1
        %s774 = smul.addr %s773, 16
        %s775 = scalar_lea.vmem [#allocation7], %s774
        // Predicated region
        $region97: #{tpu_custom_call.1} parent=91 // pred_check
          %p776 = pneg %p112
        $region98: #{tpu_custom_call.1} parent=91 // pred_check_branch
          %778 = sbr.rel (%p776) target = $region100
        $region99: #{tpu_custom_call.1} parent=91 // pred_region
          %779 = dma.done %s772, 256
        $region100: #{tpu_custom_call.1} parent=91 // pred_fallthru
          _
        // Predicated region
        $region101: #{tpu_custom_call.1} parent=91 // pred_check
          %p780 = pneg %p133
        $region102: #{tpu_custom_call.1} parent=91 // pred_check_branch
          %782 = sbr.rel (%p780) target = $region104
        $region103: #{tpu_custom_call.1} parent=91 // pred_region
          %783 = dma.done [#allocation8], 256
        $region104: #{tpu_custom_call.1} parent=91 // pred_fallthru
          _
        // Predicated region
        $region105: #{tpu_custom_call.1} parent=91 // pred_check
          %p784 = pneg %p154
        $region106: #{tpu_custom_call.1} parent=91 // pred_check_branch
          %786 = sbr.rel (%p784) target = $region108
        $region107: #{tpu_custom_call.1} parent=91 // pred_region
          %787 = dma.done [#allocation11], 16
        $region108: #{tpu_custom_call.1} parent=91 // pred_fallthru
          _
        // Predicated region
        $region109: #{tpu_custom_call.1} parent=91 // pred_check
          %p788 = pneg %p175
        $region110: #{tpu_custom_call.1} parent=91 // pred_check_branch
          %790 = sbr.rel (%p788) target = $region112
        $region111: #{tpu_custom_call.1} parent=91 // pred_region
          %791 = dma.done [#allocation11], 256
        $region112: #{tpu_custom_call.1} parent=91 // pred_fallthru
          _
        // Predicated region
        $region113: #{tpu_custom_call.1} parent=91 // pred_check
          %p792 = pneg %p196
        $region114: #{tpu_custom_call.1} parent=91 // pred_check_branch
          %794 = sbr.rel (%p792) target = $region116
        $region115: #{tpu_custom_call.1} parent=91 // pred_region
          %795 = dma.done [#allocation14], 16
        $region116: #{tpu_custom_call.1} parent=91 // pred_fallthru
          _
        // Predicated region
        $region117: #{tpu_custom_call.1} parent=91 // pred_check
          %p796 = pneg %p217
        $region118: #{tpu_custom_call.1} parent=91 // pred_check_branch
          %798 = sbr.rel (%p796) target = $region120
        $region119: #{tpu_custom_call.1} parent=91 // pred_region
          %799 = dma.done [#allocation14], 256
        $region120: #{tpu_custom_call.1} parent=91 // pred_fallthru
          _
        // Predicated region
        $region121: #{tpu_custom_call.1} parent=91 // pred_check
          %p800 = pneg %p238
        $region122: #{tpu_custom_call.1} parent=91 // pred_check_branch
          %802 = sbr.rel (%p800) target = $region124
        $region123: #{tpu_custom_call.1} parent=91 // pred_region
          %803 = dma.done [#allocation17], 16
        $region124: #{tpu_custom_call.1} parent=91 // pred_fallthru
          _
        // Predicated region
        $region125: #{tpu_custom_call.1} parent=91 // pred_check
          %p804 = pneg %p259
        $region126: #{tpu_custom_call.1} parent=91 // pred_check_branch
          %806 = sbr.rel (%p804) target = $region128
        $region127: #{tpu_custom_call.1} parent=91 // pred_region
          %807 = dma.done [#allocation17], 512
        $region128: #{tpu_custom_call.1} parent=91 // pred_fallthru
          _
        // Predicated region
        $region129: #{tpu_custom_call.1} parent=91 // pred_check
          %p808 = pneg %p280
        $region130: #{tpu_custom_call.1} parent=91 // pred_check_branch
          %810 = sbr.rel (%p808) target = $region132
        $region131: #{tpu_custom_call.1} parent=91 // pred_region
          %811 = dma.done [#allocation20], 16
        $region132: #{tpu_custom_call.1} parent=91 // pred_fallthru
          _
        // Predicated region
        $region133: #{tpu_custom_call.1} parent=91 // pred_check
          %p812 = pneg %p301
        $region134: #{tpu_custom_call.1} parent=91 // pred_check_branch
          %814 = sbr.rel (%p812) target = $region136
        $region135: #{tpu_custom_call.1} parent=91 // pred_region
          %815 = dma.done [#allocation20], 16
        $region136: #{tpu_custom_call.1} parent=91 // pred_fallthru
          _
        // Predicated region
        $region137: #{tpu_custom_call.1} parent=91 // pred_check
          %p816 = pneg %p322
        $region138: #{tpu_custom_call.1} parent=91 // pred_check_branch
          %818 = sbr.rel (%p816) target = $region140
        $region139: #{tpu_custom_call.1} parent=91 // pred_region
          %819 = dma.done [#allocation23], 16
        $region140: #{tpu_custom_call.1} parent=91 // pred_fallthru
          _
        // Predicated region
        $region141: #{tpu_custom_call.1} parent=91 // pred_check
          %p820 = pneg %p343
        $region142: #{tpu_custom_call.1} parent=91 // pred_check_branch
          %822 = sbr.rel (%p820) target = $region144
        $region143: #{tpu_custom_call.1} parent=91 // pred_region
          %823 = dma.done [#allocation23], 256
        $region144: #{tpu_custom_call.1} parent=91 // pred_fallthru
          _
        // Predicated region
        $region145: #{tpu_custom_call.1} parent=91 // pred_check
          %p824 = pneg %p364
        $region146: #{tpu_custom_call.1} parent=91 // pred_check_branch
          %826 = sbr.rel (%p824) target = $region148
        $region147: #{tpu_custom_call.1} parent=91 // pred_region
          %827 = dma.done [#allocation26], 16
        $region148: #{tpu_custom_call.1} parent=91 // pred_fallthru
          _
        // Predicated region
        $region149: #{tpu_custom_call.1} parent=91 // pred_check
          %p828 = pneg %p385
        $region150: #{tpu_custom_call.1} parent=91 // pred_check_branch
          %830 = sbr.rel (%p828) target = $region152
        $region151: #{tpu_custom_call.1} parent=91 // pred_region
          %831 = dma.done [#allocation26], 512
        $region152: #{tpu_custom_call.1} parent=91 // pred_fallthru
          _
        // Predicated region
        $region153: #{tpu_custom_call.1} parent=91 // pred_check
          %p832 = pneg %p406
        $region154: #{tpu_custom_call.1} parent=91 // pred_check_branch
          %834 = sbr.rel (%p832) target = $region156
        $region155: #{tpu_custom_call.1} parent=91 // pred_region
          %835 = dma.done [#allocation29], 16
        $region156: #{tpu_custom_call.1} parent=91 // pred_fallthru
          _
        // Predicated region
        $region157: #{tpu_custom_call.1} parent=91 // pred_check
          %p836 = pneg %p427
        $region158: #{tpu_custom_call.1} parent=91 // pred_check_branch
          %838 = sbr.rel (%p836) target = $region160
        $region159: #{tpu_custom_call.1} parent=91 // pred_region
          %839 = dma.done [#allocation29], 16
        $region160: #{tpu_custom_call.1} parent=91 // pred_fallthru
          _
        // Predicated region
        $region161: #{tpu_custom_call.1} parent=91 // pred_check
          %p840 = pneg %p448
        $region162: #{tpu_custom_call.1} parent=91 // pred_check_branch
          %842 = sbr.rel (%p840) target = $region164
        $region163: #{tpu_custom_call.1} parent=91 // pred_region
          %843 = dma.done [#allocation32], 16
        $region164: #{tpu_custom_call.1} parent=91 // pred_fallthru
          _
        %s844 = sand.u32 %s71, 1
        %s845 = scalar_lea.sflag [#allocation5], %s844
        %s846 = sand.u32 %s71, 1
        %s847 = smul.addr %s846, 16
        %s848 = scalar_lea.vmem [#allocation4], %s847
        %p849 = pneg %p84
        %p850 = pneg %p81
        %s851 = sand.u32 %s51, 1
        %s852 = scalar_lea.sflag [#allocation8], %s851
        %s853 = sand.u32 %s99, 1
        %s854 = smul.addr %s853, 16
        %s855 = scalar_lea.vmem [#allocation7], %s854
        %p856 = pneg %p112
        %p857 = pneg %p109
        %p858 = pneg %p133
        %p859 = pneg %p130
        %p860 = pneg %p154
        %p861 = pneg %p151
        %p862 = pneg %p175
        %p863 = pneg %p172
        %p864 = pneg %p196
        %p865 = pneg %p193
        %p866 = pneg %p217
        %p867 = pneg %p214
        %p868 = pneg %p238
        %p869 = pneg %p235
        %p870 = pneg %p259
        %p871 = pneg %p256
        %p872 = pneg %p280
        %p873 = pneg %p277
        %p874 = pneg %p301
        %p875 = pneg %p298
        %p876 = pneg %p322
        %p877 = pneg %p319
        %p878 = pneg %p343
        %p879 = pneg %p340
        %p880 = pneg %p364
        %p881 = pneg %p361
        %p882 = pneg %p385
        %p883 = pneg %p382
        %p884 = pneg %p406
        %p885 = pneg %p403
        %p886 = pneg %p427
        %p887 = pneg %p424
        %p888 = pneg %p448
        %p889 = pneg %p445
        %p890 = pneg %p476
        %p891 = pneg %p473
        %s892 = sand.u32 %s463, 1
        %s893 = scalar_lea.sflag [#allocation6], %s892
        %s894 = sand.u32 %s463, 1
        %s895 = smul.addr %s894, 16
        %s896 = scalar_lea.vmem [#allocation33], %s895
        %p897 = pneg %p504
        %p898 = pneg %p501
        %s899 = sand.u32 %s491, 1
        %s900 = scalar_lea.sflag [#allocation35], %s899
        %s901 = sand.u32 %s491, 1
        %s902 = smul.addr %s901, 32
        %s903 = scalar_lea.vmem [#allocation34], %s902
        %s904 = smul.u32 2, %s56
        %s905 = smul.u32 2, %s56
        %s906 = smul.u32 2, %s56
        %p908 = scmp.eq.s32.totalorder %s56, 0
        // Predicated region
        $region165: #{tpu_custom_call.1} parent=91 // pred_check
          %p909 = pneg %p908
        $region166: #{tpu_custom_call.1} parent=91 // pred_check_branch
          %911 = sbr.rel (%p909) target = $region168
        $region167: #{tpu_custom_call.1} parent=91 // pred_region
          %v912 = vld [vmem:[%s766] sm:$0xf]
          %v913 = vld [vmem:[%s766 + $0x4] sm:$0xf]
          %v914 = vld [vmem:[%s766 + $0x8] sm:$0xf]
          %v915 = vld [vmem:[%s766 + $0xc] sm:$0xf]
          %v916 = vld [vmem:[#allocation12] sm:$0xf]
          %v917 = vld [vmem:[#allocation12 + $0x4] sm:$0xf]
          %v918 = vld [vmem:[#allocation12 + $0x8] sm:$0xf]
          %v919 = vld [vmem:[#allocation12 + $0xc] sm:$0xf]
          %v920 = vld [vmem:[#allocation13] sm:$0x1]
          %v922 = vlaneseq
          %v923 = vshrl.u32 %v922, 7
          %v924 = vsub.s32 0, %v923
          %v925 = vrot.slane %v920, %v924
          %v931 = vunpack.c.l.b16 %v912
          %v932 = vunpack.c.l.b16 %v913
          %v933 = vunpack.c.l.b16 %v914
          %v934 = vunpack.c.l.b16 %v915
          %v935 = vpack.c.b16 %v932, %v931
          %v936 = vpack.c.b16 %v934, %v933
          %v941 = vunpack.c.l.b16 %v916
          %v942 = vunpack.c.l.b16 %v917
          %v943 = vunpack.c.l.b16 %v918
          %v944 = vunpack.c.l.b16 %v919
          %v945 = vpack.c.b16 %v942, %v941
          %v946 = vpack.c.b16 %v944, %v943
          %vm949 = vcmask 261120
          %v951 = vsel %vm949, %v935, 0
          %v954 = vsel %vm949, %v936, 0
          %956 = vmatprep.subr.bf16.mxu0 0
          %957 = vmatpush1.bf16.msra.mxu0 %v945
          %958 = vmatprep.subr.bf16.mxu0 0
          %959 = vmatpush1.bf16.msra.mxu0 %v946
          %960 = vmatprep.subr.bf16.mxu0 0
          %961 = vmatpush1.bf16.msra.mxu0 0
          %962 = vmatprep.subr.bf16.mxu0 0
          %963 = vmatpush1.bf16.msra.mxu0 0
          %964 = vmatprep.subr.bf16.mxu0 0
          %965 = vmatpush1.bf16.msra.mxu0 0
          %966 = vmatprep.subr.bf16.mxu0 0
          %967 = vmatpush1.bf16.msra.mxu0 0
          %968 = vmatprep.subr.bf16.mxu0 0
          %969 = vmatpush1.bf16.msra.mxu0 0
          %970 = vmatprep.subr.bf16.mxu0 0
          %971 = vmatpush1.bf16.msra.mxu0 0
          %972 = vmatprep.subr.bf16.mxu0 0
          %973 = vmatpush1.bf16.msra.mxu0 0
          %974 = vmatprep.subr.bf16.mxu0 0
          %975 = vmatpush1.bf16.msra.mxu0 0
          %976 = vmatprep.subr.bf16.mxu0 0
          %977 = vmatpush1.bf16.msra.mxu0 0
          %978 = vmatprep.subr.bf16.mxu0 0
          %979 = vmatpush1.bf16.msra.mxu0 0
          %980 = vmatprep.subr.bf16.mxu0 0
          %981 = vmatpush1.bf16.msra.mxu0 0
          %982 = vmatprep.subr.bf16.mxu0 0
          %983 = vmatpush1.bf16.msra.mxu0 0
          %984 = vmatprep.subr.bf16.mxu0 0
          %985 = vmatpush1.bf16.msra.mxu0 0
          %986 = vmatprep.subr.bf16.mxu0 0
          %987 = vmatpush1.bf16.msra.mxu0 0
          %988 = vmatprep.mubr.bf16.mxu0 0
          %989 = vmatmul.mubr.bf16.gmra.mrb[0].mxu0 %v951
          %v990 = vpop.f32.mrb[0].mxu0
          %v991 = vadd.f32 %v925, %v990
          %v992 = vpop.f32.mrb[0].mxu0
          %v993 = vpop.f32.mrb[0].mxu0
          %v994 = vadd.f32 %v925, %v993
          %v995 = vpop.f32.mrb[0].mxu0
          %996 = vmatprep.mubr.bf16.mxu0 0
          %997 = vmatmul.mubr.bf16.gmra.mrb[0].mxu0 %v954
          %v998 = vpop.f32.mrb[0].mxu0
          %v999 = vadd.f32 %v925, %v998
          %v1000 = vpop.f32.mrb[0].mxu0
          %v1001 = vpop.f32.mrb[0].mxu0
          %v1002 = vadd.f32 %v925, %v1001
          %v1003 = vpop.f32.mrb[0].mxu0
          %1004 = vdwg.mxu0
          %v1005 = vpack.c.bf16 %v994, %v991
          %v1006 = vpack.c.bf16 %v1002, %v999
          %vm1007 = vcmask 130048
          %1008 = vst.msk [vmem:[#allocation2] sm:$0xff] %vm1007, %v1005
          %1009 = vst.msk [vmem:[#allocation2 + $0x8] sm:$0xff] %vm1007, %v1006
          %1012 = vrot.lane.b32.xlu0 %v1005, 112
          %v1013 = vpop.permute.xlu0 %1012
          %1014 = vrot.lane.b32.xlu0 %v1006, 112
          %v1015 = vpop.permute.xlu0 %1014
          %s1018 = scalar_lea.vmem [#allocation2], 16
          %1019 = vst.msk [vmem:[%s1018] sm:$0xff] %vm1007, %v1013
          %1020 = vst.msk [vmem:[%s1018 + $0x8] sm:$0xff] %vm1007, %v1015
          %1021 = vrot.lane.b32.xlu0 %v1005, 96
          %v1022 = vpop.permute.xlu0 %1021
          %1023 = vrot.lane.b32.xlu0 %v1006, 96
          %v1024 = vpop.permute.xlu0 %1023
          %s1027 = scalar_lea.vmem [#allocation2], 32
          %1028 = vst.msk [vmem:[%s1027] sm:$0xff] %vm1007, %v1022
          %1029 = vst.msk [vmem:[%s1027 + $0x8] sm:$0xff] %vm1007, %v1024
          %1030 = vrot.lane.b32.xlu0 %v1005, 80
          %v1031 = vpop.permute.xlu0 %1030
          %1032 = vrot.lane.b32.xlu0 %v1006, 80
          %v1033 = vpop.permute.xlu0 %1032
          %s1036 = scalar_lea.vmem [#allocation2], 48
          %1037 = vst.msk [vmem:[%s1036] sm:$0xff] %vm1007, %v1031
          %1038 = vst.msk [vmem:[%s1036 + $0x8] sm:$0xff] %vm1007, %v1033
          %v1039 = vld [vmem:[#allocation15] sm:$0xf]
          %v1040 = vld [vmem:[#allocation15 + $0x4] sm:$0xf]
          %v1041 = vld [vmem:[#allocation15 + $0x8] sm:$0xf]
          %v1042 = vld [vmem:[#allocation15 + $0xc] sm:$0xf]
          %v1043 = vld [vmem:[#allocation16] sm:$0x1]
          %v1045 = vlaneseq
          %v1046 = vshrl.u32 %v1045, 7
          %v1047 = vsub.s32 0, %v1046
          %v1048 = vrot.slane %v1043, %v1047
          %v1054 = vunpack.c.l.b16 %v1039
          %v1055 = vunpack.c.l.b16 %v1040
          %v1056 = vunpack.c.l.b16 %v1041
          %v1057 = vunpack.c.l.b16 %v1042
          %v1058 = vpack.c.b16 %v1055, %v1054
          %v1059 = vpack.c.b16 %v1057, %v1056
          %1062 = vmatprep.subr.bf16.mxu0 0
          %1063 = vmatpush1.bf16.msra.mxu0 %v1058
          %1064 = vmatprep.subr.bf16.mxu0 0
          %1065 = vmatpush1.bf16.msra.mxu0 %v1059
          %1066 = vmatprep.subr.bf16.mxu0 0
          %1067 = vmatpush1.bf16.msra.mxu0 0
          %1068 = vmatprep.subr.bf16.mxu0 0
          %1069 = vmatpush1.bf16.msra.mxu0 0
          %1070 = vmatprep.subr.bf16.mxu0 0
          %1071 = vmatpush1.bf16.msra.mxu0 0
          %1072 = vmatprep.subr.bf16.mxu0 0
          %1073 = vmatpush1.bf16.msra.mxu0 0
          %1074 = vmatprep.subr.bf16.mxu0 0
          %1075 = vmatpush1.bf16.msra.mxu0 0
          %1076 = vmatprep.subr.bf16.mxu0 0
          %1077 = vmatpush1.bf16.msra.mxu0 0
          %1078 = vmatprep.subr.bf16.mxu0 0
          %1079 = vmatpush1.bf16.msra.mxu0 0
          %1080 = vmatprep.subr.bf16.mxu0 0
          %1081 = vmatpush1.bf16.msra.mxu0 0
          %1082 = vmatprep.subr.bf16.mxu0 0
          %1083 = vmatpush1.bf16.msra.mxu0 0
          %1084 = vmatprep.subr.bf16.mxu0 0
          %1085 = vmatpush1.bf16.msra.mxu0 0
          %1086 = vmatprep.subr.bf16.mxu0 0
          %1087 = vmatpush1.bf16.msra.mxu0 0
          %1088 = vmatprep.subr.bf16.mxu0 0
          %1089 = vmatpush1.bf16.msra.mxu0 0
          %1090 = vmatprep.subr.bf16.mxu0 0
          %1091 = vmatpush1.bf16.msra.mxu0 0
          %1092 = vmatprep.subr.bf16.mxu0 0
          %1093 = vmatpush1.bf16.msra.mxu0 0
          %1094 = vmatprep.mubr.bf16.mxu0 0
          %1095 = vmatmul.mubr.bf16.gmra.mrb[0].mxu0 %v951
          %v1096 = vpop.f32.mrb[0].mxu0
          %v1097 = vadd.f32 %v1048, %v1096
          %v1098 = vpop.f32.mrb[0].mxu0
          %v1099 = vpop.f32.mrb[0].mxu0
          %v1100 = vadd.f32 %v1048, %v1099
          %v1101 = vpop.f32.mrb[0].mxu0
          %1102 = vmatprep.mubr.bf16.mxu0 0
          %1103 = vmatmul.mubr.bf16.gmra.mrb[0].mxu0 %v954
          %v1104 = vpop.f32.mrb[0].mxu0
          %v1105 = vadd.f32 %v1048, %v1104
          %v1106 = vpop.f32.mrb[0].mxu0
          %v1107 = vpop.f32.mrb[0].mxu0
          %v1108 = vadd.f32 %v1048, %v1107
          %v1109 = vpop.f32.mrb[0].mxu0
          %1110 = vdwg.mxu0
          %v1111 = vpack.c.bf16 %v1100, %v1097
          %v1112 = vpack.c.bf16 %v1108, %v1105
          %1113 = vst.msk [vmem:[#allocation3] sm:$0xff] %vm1007, %v1111
          %1114 = vst.msk [vmem:[#allocation3 + $0x8] sm:$0xff] %vm1007, %v1112
          %1117 = vrot.lane.b32.xlu0 %v1111, 112
          %v1118 = vpop.permute.xlu0 %1117
          %1119 = vrot.lane.b32.xlu0 %v1112, 112
          %v1120 = vpop.permute.xlu0 %1119
          %s1123 = scalar_lea.vmem [#allocation3], 16
          %1124 = vst.msk [vmem:[%s1123] sm:$0xff] %vm1007, %v1118
          %1125 = vst.msk [vmem:[%s1123 + $0x8] sm:$0xff] %vm1007, %v1120
          %1126 = vrot.lane.b32.xlu0 %v1111, 96
          %v1127 = vpop.permute.xlu0 %1126
          %1128 = vrot.lane.b32.xlu0 %v1112, 96
          %v1129 = vpop.permute.xlu0 %1128
          %s1132 = scalar_lea.vmem [#allocation3], 32
          %1133 = vst.msk [vmem:[%s1132] sm:$0xff] %vm1007, %v1127
          %1134 = vst.msk [vmem:[%s1132 + $0x8] sm:$0xff] %vm1007, %v1129
          %1135 = vrot.lane.b32.xlu0 %v1111, 80
          %v1136 = vpop.permute.xlu0 %1135
          %1137 = vrot.lane.b32.xlu0 %v1112, 80
          %v1138 = vpop.permute.xlu0 %1137
          %s1141 = scalar_lea.vmem [#allocation3], 48
          %1142 = vst.msk [vmem:[%s1141] sm:$0xff] %vm1007, %v1136
          %1143 = vst.msk [vmem:[%s1141 + $0x8] sm:$0xff] %vm1007, %v1138
        $region168: #{tpu_custom_call.1} parent=91 // pred_fallthru
          _
        %v1144 = vld [vmem:[%s775] sm:$0xff]
        %v1145 = vld [vmem:[%s775 + $0x8] sm:$0xff]
        %v1146 = vpack.c.bf16 %v1145, %v1144
        %v1147 = vld [vmem:[#allocation9] sm:$0xf]
        %v1148 = vld [vmem:[#allocation9 + $0x4] sm:$0xf]
        %v1149 = vld [vmem:[#allocation9 + $0x8] sm:$0xf]
        %v1150 = vld [vmem:[#allocation9 + $0xc] sm:$0xf]
        %v1151 = vld [vmem:[#allocation10] sm:$0x1]
        %v1153 = vlaneseq
        %v1154 = vshrl.u32 %v1153, 7
        %v1155 = vsub.s32 0, %v1154
        %v1156 = vrot.slane %v1151, %v1155
        %v1162 = vunpack.c.l.b16 %v1147
        %v1163 = vunpack.c.l.b16 %v1148
        %v1164 = vunpack.c.l.b16 %v1149
        %v1165 = vunpack.c.l.b16 %v1150
        %v1166 = vpack.c.b16 %v1163, %v1162
        %v1167 = vpack.c.b16 %v1165, %v1164
        %vm1170 = vcmask 261120
        %v1172 = vsel %vm1170, %v1146, 0
        %1174 = vmatprep.subr.bf16.mxu0 0
        %1175 = vmatpush1.bf16.msra.mxu0 %v1166
        %1176 = vmatprep.subr.bf16.mxu0 0
        %1177 = vmatpush1.bf16.msra.mxu0 %v1167
        %1178 = vmatprep.subr.bf16.mxu0 0
        %1179 = vmatpush1.bf16.msra.mxu0 0
        %1180 = vmatprep.subr.bf16.mxu0 0
        %1181 = vmatpush1.bf16.msra.mxu0 0
        %1182 = vmatprep.subr.bf16.mxu0 0
        %1183 = vmatpush1.bf16.msra.mxu0 0
        %1184 = vmatprep.subr.bf16.mxu0 0
        %1185 = vmatpush1.bf16.msra.mxu0 0
        %1186 = vmatprep.subr.bf16.mxu0 0
        %1187 = vmatpush1.bf16.msra.mxu0 0
        %1188 = vmatprep.subr.bf16.mxu0 0
        %1189 = vmatpush1.bf16.msra.mxu0 0
        %1190 = vmatprep.subr.bf16.mxu0 0
        %1191 = vmatpush1.bf16.msra.mxu0 0
        %1192 = vmatprep.subr.bf16.mxu0 0
        %1193 = vmatpush1.bf16.msra.mxu0 0
        %1194 = vmatprep.subr.bf16.mxu0 0
        %1195 = vmatpush1.bf16.msra.mxu0 0
        %1196 = vmatprep.subr.bf16.mxu0 0
        %1197 = vmatpush1.bf16.msra.mxu0 0
        %1198 = vmatprep.subr.bf16.mxu0 0
        %1199 = vmatpush1.bf16.msra.mxu0 0
        %1200 = vmatprep.subr.bf16.mxu0 0
        %1201 = vmatpush1.bf16.msra.mxu0 0
        %1202 = vmatprep.subr.bf16.mxu0 0
        %1203 = vmatpush1.bf16.msra.mxu0 0
        %1204 = vmatprep.subr.bf16.mxu0 0
        %1205 = vmatpush1.bf16.msra.mxu0 0
        %1206 = vmatprep.mubr.bf16.mxu0 0
        %1207 = vmatmul.mubr.bf16.gmra.mrb[0].mxu0 %v1172
        %v1208 = vpop.f32.mrb[0].mxu0
        %v1209 = vadd.f32 %v1156, %v1208
        %v1210 = vpop.f32.mrb[0].mxu0
        %v1211 = vpop.f32.mrb[0].mxu0
        %v1212 = vadd.f32 %v1156, %v1211
        %v1213 = vpop.f32.mrb[0].mxu0
        %1214 = vdwg.mxu0
        %v1215 = vmul.f32 %v1209, 0.25
        %v1216 = vmul.f32 %v1212, 0.25
        %v1217 = vpack.c.bf16 %v1216, %v1215
        %v1218 = vld [vmem:[#allocation2] sm:$0xff]
        %v1219 = vld [vmem:[#allocation2 + $0x8] sm:$0xff]
        %vm1220 = vcmask 130048
        %v1222 = vsel %vm1220, %v1217, 0
        %v1225 = vsel %vm1220, %v1218, 0
        %v1228 = vsel %vm1220, %v1219, 0
        %1230 = vmatprep.subr.bf16.mxu0 0
        %1231 = vmatpush1.bf16.xpose.msra.mxu0 %v1225
        %1232 = vmatprep.subr.bf16.mxu0 0
        %1233 = vmatpush1.bf16.xpose.msra.mxu0 %v1228
        %1234 = vmatprep.subr.bf16.mxu0 0
        %1235 = vmatpush1.bf16.xpose.msra.mxu0 0
        %1236 = vmatprep.subr.bf16.mxu0 0
        %1237 = vmatpush1.bf16.xpose.msra.mxu0 0
        %1238 = vmatprep.subr.bf16.mxu0 0
        %1239 = vmatpush1.bf16.xpose.msra.mxu0 0
        %1240 = vmatprep.subr.bf16.mxu0 0
        %1241 = vmatpush1.bf16.xpose.msra.mxu0 0
        %1242 = vmatprep.subr.bf16.mxu0 0
        %1243 = vmatpush1.bf16.xpose.msra.mxu0 0
        %1244 = vmatprep.subr.bf16.mxu0 0
        %1245 = vmatpush1.bf16.xpose.msra.mxu0 0
        %1246 = vmatprep.subr.bf16.mxu0 0
        %1247 = vmatpush1.bf16.xpose.msra.mxu0 0
        %1248 = vmatprep.subr.bf16.mxu0 0
        %1249 = vmatpush1.bf16.xpose.msra.mxu0 0
        %1250 = vmatprep.subr.bf16.mxu0 0
        %1251 = vmatpush1.bf16.xpose.msra.mxu0 0
        %1252 = vmatprep.subr.bf16.mxu0 0
        %1253 = vmatpush1.bf16.xpose.msra.mxu0 0
        %1254 = vmatprep.subr.bf16.mxu0 0
        %1255 = vmatpush1.bf16.xpose.msra.mxu0 0
        %1256 = vmatprep.subr.bf16.mxu0 0
        %1257 = vmatpush1.bf16.xpose.msra.mxu0 0
        %1258 = vmatprep.subr.bf16.mxu0 0
        %1259 = vmatpush1.bf16.xpose.msra.mxu0 0
        %1260 = vmatprep.subr.bf16.mxu0 0
        %1261 = vmatpush1.bf16.xpose.msra.mxu0 0
        %1262 = vmatprep.mubr.bf16.mxu0 0
        %1263 = vmatmul.mubr.bf16.gmra.mrb[0].mxu0 %v1222
        %v1264 = vpop.f32.mrb[0].mxu0
        %v1265 = vadd.f32 0.0, %v1264
        %v1266 = vpop.f32.mrb[0].mxu0
        %v1267 = vpop.f32.mrb[0].mxu0
        %v1268 = vadd.f32 0.0, %v1267
        %v1269 = vpop.f32.mrb[0].mxu0
        %1270 = vdwg.mxu0
        %v1271 = vsel %vm1170, %v1265, -inf
        %1272 = vmax.xlane.f32.xlu0 %v1271
        %v1273 = vpop.xlane.xlu0 %1272
        %v1274 = vsel %vm1170, %v1268, -inf
        %1275 = vmax.xlane.f32.xlu0 %v1274
        %v1276 = vpop.xlane.xlu0 %1275
        %v1277 = vsub.f32 %v1265, %v1273
        %v1278 = vsub.f32 %v1268, %v1276
        %v1279 = vmul.f32 %v1277, 1.442695
        %v1280 = vpow.pop %v1279
        %v1281 = vmul.f32 %v1278, 1.442695
        %v1282 = vpow.pop %v1281
        %v1283 = vsel %vm1170, %v1280, 0.0
        %1284 = vadd.xlane.f32.xlu0 %v1283
        %v1285 = vpop.xlane.xlu0 %1284
        %v1286 = vsel %vm1170, %v1282, 0.0
        %1287 = vadd.xlane.f32.xlu0 %v1286
        %v1288 = vpop.xlane.xlu0 %1287
        %v1289 = vrcp.pop %v1285
        %v1290 = vrcp.pop %v1288
        %v1291 = vmul.f32 %v1280, %v1289
        %v1292 = vmul.f32 %v1282, %v1290
        %v1293 = vpack.c.bf16 %v1292, %v1291
        %v1295 = vunpack.c.l.b16 %v1293
        %v1296 = vunpack.c.h.b16 %v1293
        %v1297 = vpack.c.b16 %v1295, %v1295
        %v1298 = vpack.c.b16 %v1296, %v1296
        %vm1301 = vcmask 257024
        %1302 = vst.msk [vmem:[%s903] sm:$0xf] %vm1301, %v1297
        %1303 = vst.msk [vmem:[%s903 + $0x4] sm:$0xf] %vm1301, %v1298
        %v1304 = vld [vmem:[#allocation3] sm:$0xff]
        %v1305 = vld [vmem:[#allocation3 + $0x8] sm:$0xff]
        %v1307 = vsel %vm1170, %v1293, 0
        %1309 = vmatprep.subr.bf16.mxu0 0
        %1310 = vmatpush1.bf16.msra.mxu0 %v1304
        %1311 = vmatprep.subr.bf16.mxu0 0
        %1312 = vmatpush1.bf16.msra.mxu0 %v1305
        %1313 = vmatprep.subr.bf16.mxu0 0
        %1314 = vmatpush1.bf16.msra.mxu0 0
        %1315 = vmatprep.subr.bf16.mxu0 0
        %1316 = vmatpush1.bf16.msra.mxu0 0
        %1317 = vmatprep.subr.bf16.mxu0 0
        %1318 = vmatpush1.bf16.msra.mxu0 0
        %1319 = vmatprep.subr.bf16.mxu0 0
        %1320 = vmatpush1.bf16.msra.mxu0 0
        %1321 = vmatprep.subr.bf16.mxu0 0
        %1322 = vmatpush1.bf16.msra.mxu0 0
        %1323 = vmatprep.subr.bf16.mxu0 0
        %1324 = vmatpush1.bf16.msra.mxu0 0
        %1325 = vmatprep.subr.bf16.mxu0 0
        %1326 = vmatpush1.bf16.msra.mxu0 0
        %1327 = vmatprep.subr.bf16.mxu0 0
        %1328 = vmatpush1.bf16.msra.mxu0 0
        %1329 = vmatprep.subr.bf16.mxu0 0
        %1330 = vmatpush1.bf16.msra.mxu0 0
        %1331 = vmatprep.subr.bf16.mxu0 0
        %1332 = vmatpush1.bf16.msra.mxu0 0
        %1333 = vmatprep.subr.bf16.mxu0 0
        %1334 = vmatpush1.bf16.msra.mxu0 0
        %1335 = vmatprep.subr.bf16.mxu0 0
        %1336 = vmatpush1.bf16.msra.mxu0 0
        %1337 = vmatprep.subr.bf16.mxu0 0
        %1338 = vmatpush1.bf16.msra.mxu0 0
        %1339 = vmatprep.subr.bf16.mxu0 0
        %1340 = vmatpush1.bf16.msra.mxu0 0
        %1341 = vmatprep.mubr.bf16.mxu0 0
        %1342 = vmatmul.mubr.bf16.gmra.mrb[0].mxu0 %v1307
        %v1343 = vpop.f32.mrb[0].mxu0
        %v1344 = vadd.f32 0.0, %v1343
        %v1345 = vpop.f32.mrb[0].mxu0
        %v1346 = vpop.f32.mrb[0].mxu0
        %v1347 = vadd.f32 0.0, %v1346
        %v1348 = vpop.f32.mrb[0].mxu0
        %1349 = vdwg.mxu0
        %s1350 = scalar_lea.vmem [#allocation2], 16
        %v1351 = vld [vmem:[%s1350] sm:$0xff]
        %v1352 = vld [vmem:[%s1350 + $0x8] sm:$0xff]
        %1354 = vrot.lane.b32.xlu0 %v1217, 112
        %v1355 = vpop.permute.xlu0 %1354
        %v1357 = vsel %vm1220, %v1355, 0
        %v1360 = vsel %vm1220, %v1351, 0
        %v1363 = vsel %vm1220, %v1352, 0
        %1365 = vmatprep.subr.bf16.mxu0 0
        %1366 = vmatpush1.bf16.xpose.msra.mxu0 %v1360
        %1367 = vmatprep.subr.bf16.mxu0 0
        %1368 = vmatpush1.bf16.xpose.msra.mxu0 %v1363
        %1369 = vmatprep.subr.bf16.mxu0 0
        %1370 = vmatpush1.bf16.xpose.msra.mxu0 0
        %1371 = vmatprep.subr.bf16.mxu0 0
        %1372 = vmatpush1.bf16.xpose.msra.mxu0 0
        %1373 = vmatprep.subr.bf16.mxu0 0
        %1374 = vmatpush1.bf16.xpose.msra.mxu0 0
        %1375 = vmatprep.subr.bf16.mxu0 0
        %1376 = vmatpush1.bf16.xpose.msra.mxu0 0
        %1377 = vmatprep.subr.bf16.mxu0 0
        %1378 = vmatpush1.bf16.xpose.msra.mxu0 0
        %1379 = vmatprep.subr.bf16.mxu0 0
        %1380 = vmatpush1.bf16.xpose.msra.mxu0 0
        %1381 = vmatprep.subr.bf16.mxu0 0
        %1382 = vmatpush1.bf16.xpose.msra.mxu0 0
        %1383 = vmatprep.subr.bf16.mxu0 0
        %1384 = vmatpush1.bf16.xpose.msra.mxu0 0
        %1385 = vmatprep.subr.bf16.mxu0 0
        %1386 = vmatpush1.bf16.xpose.msra.mxu0 0
        %1387 = vmatprep.subr.bf16.mxu0 0
        %1388 = vmatpush1.bf16.xpose.msra.mxu0 0
        %1389 = vmatprep.subr.bf16.mxu0 0
        %1390 = vmatpush1.bf16.xpose.msra.mxu0 0
        %1391 = vmatprep.subr.bf16.mxu0 0
        %1392 = vmatpush1.bf16.xpose.msra.mxu0 0
        %1393 = vmatprep.subr.bf16.mxu0 0
        %1394 = vmatpush1.bf16.xpose.msra.mxu0 0
        %1395 = vmatprep.subr.bf16.mxu0 0
        %1396 = vmatpush1.bf16.xpose.msra.mxu0 0
        %1397 = vmatprep.mubr.bf16.mxu0 0
        %1398 = vmatmul.mubr.bf16.gmra.mrb[0].mxu0 %v1357
        %v1399 = vpop.f32.mrb[0].mxu0
        %v1400 = vadd.f32 0.0, %v1399
        %v1401 = vpop.f32.mrb[0].mxu0
        %v1402 = vpop.f32.mrb[0].mxu0
        %v1403 = vadd.f32 0.0, %v1402
        %v1404 = vpop.f32.mrb[0].mxu0
        %1405 = vdwg.mxu0
        %v1406 = vsel %vm1170, %v1400, -inf
        %1407 = vmax.xlane.f32.xlu0 %v1406
        %v1408 = vpop.xlane.xlu0 %1407
        %v1409 = vsel %vm1170, %v1403, -inf
        %1410 = vmax.xlane.f32.xlu0 %v1409
        %v1411 = vpop.xlane.xlu0 %1410
        %v1412 = vsub.f32 %v1400, %v1408
        %v1413 = vsub.f32 %v1403, %v1411
        %v1414 = vmul.f32 %v1412, 1.442695
        %v1415 = vpow.pop %v1414
        %v1416 = vmul.f32 %v1413, 1.442695
        %v1417 = vpow.pop %v1416
        %v1418 = vsel %vm1170, %v1415, 0.0
        %1419 = vadd.xlane.f32.xlu0 %v1418
        %v1420 = vpop.xlane.xlu0 %1419
        %v1421 = vsel %vm1170, %v1417, 0.0
        %1422 = vadd.xlane.f32.xlu0 %v1421
        %v1423 = vpop.xlane.xlu0 %1422
        %v1424 = vrcp.pop %v1420
        %v1425 = vrcp.pop %v1423
        %v1426 = vmul.f32 %v1415, %v1424
        %v1427 = vmul.f32 %v1417, %v1425
        %v1428 = vpack.c.bf16 %v1427, %v1426
        %v1430 = vunpack.c.l.b16 %v1428
        %v1431 = vunpack.c.h.b16 %v1428
        %v1432 = vpack.c.b16 %v1430, %v1430
        %v1433 = vpack.c.b16 %v1431, %v1431
        %s1436 = scalar_lea.vmem %s903, 8 [#allocation34]
        %1437 = vst.msk [vmem:[%s1436] sm:$0xf] %vm1301, %v1432
        %1438 = vst.msk [vmem:[%s1436 + $0x4] sm:$0xf] %vm1301, %v1433
        %s1439 = scalar_lea.vmem [#allocation3], 16
        %v1440 = vld [vmem:[%s1439] sm:$0xff]
        %v1441 = vld [vmem:[%s1439 + $0x8] sm:$0xff]
        %v1443 = vsel %vm1170, %v1428, 0
        %1445 = vmatprep.subr.bf16.mxu0 0
        %1446 = vmatpush1.bf16.msra.mxu0 %v1440
        %1447 = vmatprep.subr.bf16.mxu0 0
        %1448 = vmatpush1.bf16.msra.mxu0 %v1441
        %1449 = vmatprep.subr.bf16.mxu0 0
        %1450 = vmatpush1.bf16.msra.mxu0 0
        %1451 = vmatprep.subr.bf16.mxu0 0
        %1452 = vmatpush1.bf16.msra.mxu0 0
        %1453 = vmatprep.subr.bf16.mxu0 0
        %1454 = vmatpush1.bf16.msra.mxu0 0
        %1455 = vmatprep.subr.bf16.mxu0 0
        %1456 = vmatpush1.bf16.msra.mxu0 0
        %1457 = vmatprep.subr.bf16.mxu0 0
        %1458 = vmatpush1.bf16.msra.mxu0 0
        %1459 = vmatprep.subr.bf16.mxu0 0
        %1460 = vmatpush1.bf16.msra.mxu0 0
        %1461 = vmatprep.subr.bf16.mxu0 0
        %1462 = vmatpush1.bf16.msra.mxu0 0
        %1463 = vmatprep.subr.bf16.mxu0 0
        %1464 = vmatpush1.bf16.msra.mxu0 0
        %1465 = vmatprep.subr.bf16.mxu0 0
        %1466 = vmatpush1.bf16.msra.mxu0 0
        %1467 = vmatprep.subr.bf16.mxu0 0
        %1468 = vmatpush1.bf16.msra.mxu0 0
        %1469 = vmatprep.subr.bf16.mxu0 0
        %1470 = vmatpush1.bf16.msra.mxu0 0
        %1471 = vmatprep.subr.bf16.mxu0 0
        %1472 = vmatpush1.bf16.msra.mxu0 0
        %1473 = vmatprep.subr.bf16.mxu0 0
        %1474 = vmatpush1.bf16.msra.mxu0 0
        %1475 = vmatprep.subr.bf16.mxu0 0
        %1476 = vmatpush1.bf16.msra.mxu0 0
        %1477 = vmatprep.mubr.bf16.mxu0 0
        %1478 = vmatmul.mubr.bf16.gmra.mrb[0].mxu0 %v1443
        %v1479 = vpop.f32.mrb[0].mxu0
        %v1480 = vadd.f32 0.0, %v1479
        %v1481 = vpop.f32.mrb[0].mxu0
        %v1482 = vpop.f32.mrb[0].mxu0
        %v1483 = vadd.f32 0.0, %v1482
        %v1484 = vpop.f32.mrb[0].mxu0
        %1485 = vdwg.mxu0
        %s1486 = scalar_lea.vmem [#allocation2], 32
        %v1487 = vld [vmem:[%s1486] sm:$0xff]
        %v1488 = vld [vmem:[%s1486 + $0x8] sm:$0xff]
        %1489 = vrot.lane.b32.xlu0 %v1217, 96
        %v1490 = vpop.permute.xlu0 %1489
        %v1492 = vsel %vm1220, %v1490, 0
        %v1495 = vsel %vm1220, %v1487, 0
        %v1498 = vsel %vm1220, %v1488, 0
        %1500 = vmatprep.subr.bf16.mxu0 0
        %1501 = vmatpush1.bf16.xpose.msra.mxu0 %v1495
        %1502 = vmatprep.subr.bf16.mxu0 0
        %1503 = vmatpush1.bf16.xpose.msra.mxu0 %v1498
        %1504 = vmatprep.subr.bf16.mxu0 0
        %1505 = vmatpush1.bf16.xpose.msra.mxu0 0
        %1506 = vmatprep.subr.bf16.mxu0 0
        %1507 = vmatpush1.bf16.xpose.msra.mxu0 0
        %1508 = vmatprep.subr.bf16.mxu0 0
        %1509 = vmatpush1.bf16.xpose.msra.mxu0 0
        %1510 = vmatprep.subr.bf16.mxu0 0
        %1511 = vmatpush1.bf16.xpose.msra.mxu0 0
        %1512 = vmatprep.subr.bf16.mxu0 0
        %1513 = vmatpush1.bf16.xpose.msra.mxu0 0
        %1514 = vmatprep.subr.bf16.mxu0 0
        %1515 = vmatpush1.bf16.xpose.msra.mxu0 0
        %1516 = vmatprep.subr.bf16.mxu0 0
        %1517 = vmatpush1.bf16.xpose.msra.mxu0 0
        %1518 = vmatprep.subr.bf16.mxu0 0
        %1519 = vmatpush1.bf16.xpose.msra.mxu0 0
        %1520 = vmatprep.subr.bf16.mxu0 0
        %1521 = vmatpush1.bf16.xpose.msra.mxu0 0
        %1522 = vmatprep.subr.bf16.mxu0 0
        %1523 = vmatpush1.bf16.xpose.msra.mxu0 0
        %1524 = vmatprep.subr.bf16.mxu0 0
        %1525 = vmatpush1.bf16.xpose.msra.mxu0 0
        %1526 = vmatprep.subr.bf16.mxu0 0
        %1527 = vmatpush1.bf16.xpose.msra.mxu0 0
        %1528 = vmatprep.subr.bf16.mxu0 0
        %1529 = vmatpush1.bf16.xpose.msra.mxu0 0
        %1530 = vmatprep.subr.bf16.mxu0 0
        %1531 = vmatpush1.bf16.xpose.msra.mxu0 0
        %1532 = vmatprep.mubr.bf16.mxu0 0
        %1533 = vmatmul.mubr.bf16.gmra.mrb[0].mxu0 %v1492
        %v1534 = vpop.f32.mrb[0].mxu0
        %v1535 = vadd.f32 0.0, %v1534
        %v1536 = vpop.f32.mrb[0].mxu0
        %v1537 = vpop.f32.mrb[0].mxu0
        %v1538 = vadd.f32 0.0, %v1537
        %v1539 = vpop.f32.mrb[0].mxu0
        %1540 = vdwg.mxu0
        %v1541 = vsel %vm1170, %v1535, -inf
        %1542 = vmax.xlane.f32.xlu0 %v1541
        %v1543 = vpop.xlane.xlu0 %1542
        %v1544 = vsel %vm1170, %v1538, -inf
        %1545 = vmax.xlane.f32.xlu0 %v1544
        %v1546 = vpop.xlane.xlu0 %1545
        %v1547 = vsub.f32 %v1535, %v1543
        %v1548 = vsub.f32 %v1538, %v1546
        %v1549 = vmul.f32 %v1547, 1.442695
        %v1550 = vpow.pop %v1549
        %v1551 = vmul.f32 %v1548, 1.442695
        %v1552 = vpow.pop %v1551
        %v1553 = vsel %vm1170, %v1550, 0.0
        %1554 = vadd.xlane.f32.xlu0 %v1553
        %v1555 = vpop.xlane.xlu0 %1554
        %v1556 = vsel %vm1170, %v1552, 0.0
        %1557 = vadd.xlane.f32.xlu0 %v1556
        %v1558 = vpop.xlane.xlu0 %1557
        %v1559 = vrcp.pop %v1555
        %v1560 = vrcp.pop %v1558
        %v1561 = vmul.f32 %v1550, %v1559
        %v1562 = vmul.f32 %v1552, %v1560
        %v1563 = vpack.c.bf16 %v1562, %v1561
        %v1565 = vunpack.c.l.b16 %v1563
        %v1566 = vunpack.c.h.b16 %v1563
        %v1567 = vpack.c.b16 %v1565, %v1565
        %v1568 = vpack.c.b16 %v1566, %v1566
        %s1571 = scalar_lea.vmem %s903, 16 [#allocation34]
        %1572 = vst.msk [vmem:[%s1571] sm:$0xf] %vm1301, %v1567
        %1573 = vst.msk [vmem:[%s1571 + $0x4] sm:$0xf] %vm1301, %v1568
        %s1574 = scalar_lea.vmem [#allocation3], 32
        %v1575 = vld [vmem:[%s1574] sm:$0xff]
        %v1576 = vld [vmem:[%s1574 + $0x8] sm:$0xff]
        %v1578 = vsel %vm1170, %v1563, 0
        %1580 = vmatprep.subr.bf16.mxu0 0
        %1581 = vmatpush1.bf16.msra.mxu0 %v1575
        %1582 = vmatprep.subr.bf16.mxu0 0
        %1583 = vmatpush1.bf16.msra.mxu0 %v1576
        %1584 = vmatprep.subr.bf16.mxu0 0
        %1585 = vmatpush1.bf16.msra.mxu0 0
        %1586 = vmatprep.subr.bf16.mxu0 0
        %1587 = vmatpush1.bf16.msra.mxu0 0
        %1588 = vmatprep.subr.bf16.mxu0 0
        %1589 = vmatpush1.bf16.msra.mxu0 0
        %1590 = vmatprep.subr.bf16.mxu0 0
        %1591 = vmatpush1.bf16.msra.mxu0 0
        %1592 = vmatprep.subr.bf16.mxu0 0
        %1593 = vmatpush1.bf16.msra.mxu0 0
        %1594 = vmatprep.subr.bf16.mxu0 0
        %1595 = vmatpush1.bf16.msra.mxu0 0
        %1596 = vmatprep.subr.bf16.mxu0 0
        %1597 = vmatpush1.bf16.msra.mxu0 0
        %1598 = vmatprep.subr.bf16.mxu0 0
        %1599 = vmatpush1.bf16.msra.mxu0 0
        %1600 = vmatprep.subr.bf16.mxu0 0
        %1601 = vmatpush1.bf16.msra.mxu0 0
        %1602 = vmatprep.subr.bf16.mxu0 0
        %1603 = vmatpush1.bf16.msra.mxu0 0
        %1604 = vmatprep.subr.bf16.mxu0 0
        %1605 = vmatpush1.bf16.msra.mxu0 0
        %1606 = vmatprep.subr.bf16.mxu0 0
        %1607 = vmatpush1.bf16.msra.mxu0 0
        %1608 = vmatprep.subr.bf16.mxu0 0
        %1609 = vmatpush1.bf16.msra.mxu0 0
        %1610 = vmatprep.subr.bf16.mxu0 0
        %1611 = vmatpush1.bf16.msra.mxu0 0
        %1612 = vmatprep.mubr.bf16.mxu0 0
        %1613 = vmatmul.mubr.bf16.gmra.mrb[0].mxu0 %v1578
        %v1614 = vpop.f32.mrb[0].mxu0
        %v1615 = vadd.f32 0.0, %v1614
        %v1616 = vpop.f32.mrb[0].mxu0
        %v1617 = vpop.f32.mrb[0].mxu0
        %v1618 = vadd.f32 0.0, %v1617
        %v1619 = vpop.f32.mrb[0].mxu0
        %1620 = vdwg.mxu0
        %s1621 = scalar_lea.vmem [#allocation2], 48
        %v1622 = vld [vmem:[%s1621] sm:$0xff]
        %v1623 = vld [vmem:[%s1621 + $0x8] sm:$0xff]
        %1624 = vrot.lane.b32.xlu0 %v1217, 80
        %v1625 = vpop.permute.xlu0 %1624
        %v1627 = vsel %vm1220, %v1625, 0
        %v1630 = vsel %vm1220, %v1622, 0
        %v1633 = vsel %vm1220, %v1623, 0
        %1635 = vmatprep.subr.bf16.mxu0 0
        %1636 = vmatpush1.bf16.xpose.msra.mxu0 %v1630
        %1637 = vmatprep.subr.bf16.mxu0 0
        %1638 = vmatpush1.bf16.xpose.msra.mxu0 %v1633
        %1639 = vmatprep.subr.bf16.mxu0 0
        %1640 = vmatpush1.bf16.xpose.msra.mxu0 0
        %1641 = vmatprep.subr.bf16.mxu0 0
        %1642 = vmatpush1.bf16.xpose.msra.mxu0 0
        %1643 = vmatprep.subr.bf16.mxu0 0
        %1644 = vmatpush1.bf16.xpose.msra.mxu0 0
        %1645 = vmatprep.subr.bf16.mxu0 0
        %1646 = vmatpush1.bf16.xpose.msra.mxu0 0
        %1647 = vmatprep.subr.bf16.mxu0 0
        %1648 = vmatpush1.bf16.xpose.msra.mxu0 0
        %1649 = vmatprep.subr.bf16.mxu0 0
        %1650 = vmatpush1.bf16.xpose.msra.mxu0 0
        %1651 = vmatprep.subr.bf16.mxu0 0
        %1652 = vmatpush1.bf16.xpose.msra.mxu0 0
        %1653 = vmatprep.subr.bf16.mxu0 0
        %1654 = vmatpush1.bf16.xpose.msra.mxu0 0
        %1655 = vmatprep.subr.bf16.mxu0 0
        %1656 = vmatpush1.bf16.xpose.msra.mxu0 0
        %1657 = vmatprep.subr.bf16.mxu0 0
        %1658 = vmatpush1.bf16.xpose.msra.mxu0 0
        %1659 = vmatprep.subr.bf16.mxu0 0
        %1660 = vmatpush1.bf16.xpose.msra.mxu0 0
        %1661 = vmatprep.subr.bf16.mxu0 0
        %1662 = vmatpush1.bf16.xpose.msra.mxu0 0
        %1663 = vmatprep.subr.bf16.mxu0 0
        %1664 = vmatpush1.bf16.xpose.msra.mxu0 0
        %1665 = vmatprep.subr.bf16.mxu0 0
        %1666 = vmatpush1.bf16.xpose.msra.mxu0 0
        %1667 = vmatprep.mubr.bf16.mxu0 0
        %1668 = vmatmul.mubr.bf16.gmra.mrb[0].mxu0 %v1627
        %v1669 = vpop.f32.mrb[0].mxu0
        %v1670 = vadd.f32 0.0, %v1669
        %v1671 = vpop.f32.mrb[0].mxu0
        %v1672 = vpop.f32.mrb[0].mxu0
        %v1673 = vadd.f32 0.0, %v1672
        %v1674 = vpop.f32.mrb[0].mxu0
        %1675 = vdwg.mxu0
        %v1676 = vsel %vm1170, %v1670, -inf
        %1677 = vmax.xlane.f32.xlu0 %v1676
        %v1678 = vpop.xlane.xlu0 %1677
        %v1679 = vsel %vm1170, %v1673, -inf
        %1680 = vmax.xlane.f32.xlu0 %v1679
        %v1681 = vpop.xlane.xlu0 %1680
        %v1682 = vsub.f32 %v1670, %v1678
        %v1683 = vsub.f32 %v1673, %v1681
        %v1684 = vmul.f32 %v1682, 1.442695
        %v1685 = vpow.pop %v1684
        %v1686 = vmul.f32 %v1683, 1.442695
        %v1687 = vpow.pop %v1686
        %v1688 = vsel %vm1170, %v1685, 0.0
        %1689 = vadd.xlane.f32.xlu0 %v1688
        %v1690 = vpop.xlane.xlu0 %1689
        %v1691 = vsel %vm1170, %v1687, 0.0
        %1692 = vadd.xlane.f32.xlu0 %v1691
        %v1693 = vpop.xlane.xlu0 %1692
        %v1694 = vrcp.pop %v1690
        %v1695 = vrcp.pop %v1693
        %v1696 = vmul.f32 %v1685, %v1694
        %v1697 = vmul.f32 %v1687, %v1695
        %v1698 = vpack.c.bf16 %v1697, %v1696
        %v1700 = vunpack.c.l.b16 %v1698
        %v1701 = vunpack.c.h.b16 %v1698
        %v1702 = vpack.c.b16 %v1700, %v1700
        %v1703 = vpack.c.b16 %v1701, %v1701
        %s1706 = scalar_lea.vmem %s903, 24 [#allocation34]
        %1707 = vst.msk [vmem:[%s1706] sm:$0xf] %vm1301, %v1702
        %1708 = vst.msk [vmem:[%s1706 + $0x4] sm:$0xf] %vm1301, %v1703
        %s1709 = scalar_lea.vmem [#allocation3], 48
        %v1710 = vld [vmem:[%s1709] sm:$0xff]
        %v1711 = vld [vmem:[%s1709 + $0x8] sm:$0xff]
        %v1713 = vsel %vm1170, %v1698, 0
        %1715 = vmatprep.subr.bf16.mxu0 0
        %1716 = vmatpush1.bf16.msra.mxu0 %v1710
        %1717 = vmatprep.subr.bf16.mxu0 0
        %1718 = vmatpush1.bf16.msra.mxu0 %v1711
        %1719 = vmatprep.subr.bf16.mxu0 0
        %1720 = vmatpush1.bf16.msra.mxu0 0
        %1721 = vmatprep.subr.bf16.mxu0 0
        %1722 = vmatpush1.bf16.msra.mxu0 0
        %1723 = vmatprep.subr.bf16.mxu0 0
        %1724 = vmatpush1.bf16.msra.mxu0 0
        %1725 = vmatprep.subr.bf16.mxu0 0
        %1726 = vmatpush1.bf16.msra.mxu0 0
        %1727 = vmatprep.subr.bf16.mxu0 0
        %1728 = vmatpush1.bf16.msra.mxu0 0
        %1729 = vmatprep.subr.bf16.mxu0 0
        %1730 = vmatpush1.bf16.msra.mxu0 0
        %1731 = vmatprep.subr.bf16.mxu0 0
        %1732 = vmatpush1.bf16.msra.mxu0 0
        %1733 = vmatprep.subr.bf16.mxu0 0
        %1734 = vmatpush1.bf16.msra.mxu0 0
        %1735 = vmatprep.subr.bf16.mxu0 0
        %1736 = vmatpush1.bf16.msra.mxu0 0
        %1737 = vmatprep.subr.bf16.mxu0 0
        %1738 = vmatpush1.bf16.msra.mxu0 0
        %1739 = vmatprep.subr.bf16.mxu0 0
        %1740 = vmatpush1.bf16.msra.mxu0 0
        %1741 = vmatprep.subr.bf16.mxu0 0
        %1742 = vmatpush1.bf16.msra.mxu0 0
        %1743 = vmatprep.subr.bf16.mxu0 0
        %1744 = vmatpush1.bf16.msra.mxu0 0
        %1745 = vmatprep.subr.bf16.mxu0 0
        %1746 = vmatpush1.bf16.msra.mxu0 0
        %1747 = vmatprep.mubr.bf16.mxu0 0
        %1748 = vmatmul.mubr.bf16.gmra.mrb[0].mxu0 %v1713
        %v1749 = vpop.f32.mrb[0].mxu0
        %v1750 = vadd.f32 0.0, %v1749
        %v1751 = vpop.f32.mrb[0].mxu0
        %v1752 = vpop.f32.mrb[0].mxu0
        %v1753 = vadd.f32 0.0, %v1752
        %v1754 = vpop.f32.mrb[0].mxu0
        %1755 = vdwg.mxu0
        %1758 = vrot.lane.b32.xlu0 %v1480, 16
        %v1759 = vpop.permute.xlu0 %1758
        %1760 = vrot.lane.b32.xlu0 %v1483, 16
        %v1761 = vpop.permute.xlu0 %1760
        %1766 = vrot.lane.b32.xlu0 %v1615, 32
        %v1767 = vpop.permute.xlu0 %1766
        %1768 = vrot.lane.b32.xlu0 %v1618, 32
        %v1769 = vpop.permute.xlu0 %1768
        %1774 = vrot.lane.b32.xlu0 %v1750, 48
        %v1775 = vpop.permute.xlu0 %1774
        %1776 = vrot.lane.b32.xlu0 %v1753, 48
        %v1777 = vpop.permute.xlu0 %1776
        %v1780 = vsel %vm1220, %v1344, %v1759
        %v1781 = vsel %vm1220, %v1347, %v1761
        %v1782 = vsel %vm1170, %v1780, %v1767
        %v1783 = vsel %vm1170, %v1781, %v1769
        %vm1784 = vcmask 392192
        %v1785 = vsel %vm1784, %v1782, %v1775
        %v1786 = vsel %vm1784, %v1783, %v1777
        %v1787 = vpack.c.bf16 %v1786, %v1785
        %v1788 = vld [vmem:[#allocation18] sm:$0xf]
        %v1789 = vld [vmem:[#allocation18 + $0x4] sm:$0xf]
        %v1790 = vld [vmem:[#allocation18 + $0x8] sm:$0xf]
        %v1791 = vld [vmem:[#allocation18 + $0xc] sm:$0xf]
        %v1792 = vld [vmem:[#allocation18 + $0x10] sm:$0xf]
        %v1793 = vld [vmem:[#allocation18 + $0x14] sm:$0xf]
        %v1794 = vld [vmem:[#allocation18 + $0x18] sm:$0xf]
        %v1795 = vld [vmem:[#allocation18 + $0x1c] sm:$0xf]
        %v1796 = vld [vmem:[#allocation19] sm:$0x1]
        %v1798 = vlaneseq
        %v1799 = vshrl.u32 %v1798, 7
        %v1800 = vsub.s32 0, %v1799
        %v1801 = vrot.slane %v1796, %v1800
        %v1811 = vunpack.c.l.b16 %v1788
        %v1812 = vunpack.c.l.b16 %v1789
        %v1813 = vunpack.c.l.b16 %v1790
        %v1814 = vunpack.c.l.b16 %v1791
        %v1815 = vunpack.c.l.b16 %v1792
        %v1816 = vunpack.c.l.b16 %v1793
        %v1817 = vunpack.c.l.b16 %v1794
        %v1818 = vunpack.c.l.b16 %v1795
        %v1819 = vpack.c.b16 %v1812, %v1811
        %v1820 = vpack.c.b16 %v1814, %v1813
        %v1821 = vpack.c.b16 %v1816, %v1815
        %v1822 = vpack.c.b16 %v1818, %v1817
        %vm1827 = vcmask 523264
        %v1829 = vsel %vm1827, %v1787, 0
        %1831 = vmatprep.subr.bf16.mxu0 0
        %1832 = vmatpush1.bf16.msra.mxu0 %v1819
        %1833 = vmatprep.subr.bf16.mxu0 0
        %1834 = vmatpush1.bf16.msra.mxu0 %v1820
        %1835 = vmatprep.subr.bf16.mxu0 0
        %1836 = vmatpush1.bf16.msra.mxu0 %v1821
        %1837 = vmatprep.subr.bf16.mxu0 0
        %1838 = vmatpush1.bf16.msra.mxu0 %v1822
        %1839 = vmatprep.subr.bf16.mxu0 0
        %1840 = vmatpush1.bf16.msra.mxu0 0
        %1841 = vmatprep.subr.bf16.mxu0 0
        %1842 = vmatpush1.bf16.msra.mxu0 0
        %1843 = vmatprep.subr.bf16.mxu0 0
        %1844 = vmatpush1.bf16.msra.mxu0 0
        %1845 = vmatprep.subr.bf16.mxu0 0
        %1846 = vmatpush1.bf16.msra.mxu0 0
        %1847 = vmatprep.subr.bf16.mxu0 0
        %1848 = vmatpush1.bf16.msra.mxu0 0
        %1849 = vmatprep.subr.bf16.mxu0 0
        %1850 = vmatpush1.bf16.msra.mxu0 0
        %1851 = vmatprep.subr.bf16.mxu0 0
        %1852 = vmatpush1.bf16.msra.mxu0 0
        %1853 = vmatprep.subr.bf16.mxu0 0
        %1854 = vmatpush1.bf16.msra.mxu0 0
        %1855 = vmatprep.subr.bf16.mxu0 0
        %1856 = vmatpush1.bf16.msra.mxu0 0
        %1857 = vmatprep.subr.bf16.mxu0 0
        %1858 = vmatpush1.bf16.msra.mxu0 0
        %1859 = vmatprep.subr.bf16.mxu0 0
        %1860 = vmatpush1.bf16.msra.mxu0 0
        %1861 = vmatprep.subr.bf16.mxu0 0
        %1862 = vmatpush1.bf16.msra.mxu0 0
        %1863 = vmatprep.mubr.bf16.mxu0 0
        %1864 = vmatmul.mubr.bf16.gmra.mrb[0].mxu0 %v1829
        %v1865 = vpop.f32.mrb[0].mxu0
        %v1866 = vadd.f32 %v1801, %v1865
        %v1867 = vpop.f32.mrb[0].mxu0
        %v1868 = vpop.f32.mrb[0].mxu0
        %v1869 = vadd.f32 %v1801, %v1868
        %v1870 = vpop.f32.mrb[0].mxu0
        %1871 = vdwg.mxu0
        %v1872 = vadd.f32 %v1866, %v1144
        %v1873 = vadd.f32 %v1869, %v1145
        %v1874 = vld [vmem:[#allocation21] sm:$0x1]
        %v1875 = vld [vmem:[#allocation22] sm:$0x1]
        %v1876 = vsel %vm1170, %v1872, 0.0
        %1877 = vadd.xlane.f32.xlu0 %v1876
        %v1878 = vpop.xlane.xlu0 %1877
        %v1879 = vsel %vm1170, %v1873, 0.0
        %1880 = vadd.xlane.f32.xlu0 %v1879
        %v1881 = vpop.xlane.xlu0 %1880
        %v1882 = vrcp.pop 32.0
        %v1883 = vmul.f32 %v1878, %v1882
        %v1884 = vmul.f32 %v1881, %v1882
        %v1885 = vsub.f32 %v1872, %v1883
        %v1886 = vsub.f32 %v1873, %v1884
        %v1887 = vmul.f32 %v1885, %v1885
        %v1888 = vmul.f32 %v1886, %v1886
        %v1889 = vsel %vm1170, %v1887, 0.0
        %1890 = vadd.xlane.f32.xlu0 %v1889
        %v1891 = vpop.xlane.xlu0 %1890
        %v1892 = vsel %vm1170, %v1888, 0.0
        %1893 = vadd.xlane.f32.xlu0 %v1892
        %v1894 = vpop.xlane.xlu0 %1893
        %v1895 = vmul.f32 %v1891, %v1882
        %v1896 = vmul.f32 %v1894, %v1882
        %v1897 = vadd.f32 %v1895, 1e-05
        %v1898 = vadd.f32 %v1896, 1e-05
        %v1899 = vrsqrt.pop %v1897
        %v1900 = vrsqrt.pop %v1898
        %v1901 = vmul.f32 %v1885, %v1899
        %v1902 = vmul.f32 %v1886, %v1900
        %v1904 = vlaneseq
        %v1905 = vshrl.u32 %v1904, 7
        %v1906 = vsub.s32 0, %v1905
        %v1907 = vrot.slane %v1874, %v1906
        %v1909 = vmul.f32 %v1901, %v1907
        %v1910 = vmul.f32 %v1902, %v1907
        %v1912 = vlaneseq
        %v1913 = vshrl.u32 %v1912, 7
        %v1914 = vsub.s32 0, %v1913
        %v1915 = vrot.slane %v1875, %v1914
        %v1917 = vadd.f32 %v1909, %v1915
        %v1918 = vadd.f32 %v1910, %v1915
        %v1919 = vpack.c.bf16 %v1918, %v1917
        %v1920 = vld [vmem:[#allocation24] sm:$0xf]
        %v1921 = vld [vmem:[#allocation24 + $0x4] sm:$0xf]
        %v1922 = vld [vmem:[#allocation24 + $0x8] sm:$0xf]
        %v1923 = vld [vmem:[#allocation24 + $0xc] sm:$0xf]
        %v1924 = vld [vmem:[#allocation25] sm:$0x1]
        %v1926 = vlaneseq
        %v1927 = vshrl.u32 %v1926, 7
        %v1928 = vsub.s32 0, %v1927
        %v1929 = vrot.slane %v1924, %v1928
        %v1935 = vunpack.c.l.b16 %v1920
        %v1936 = vunpack.c.l.b16 %v1921
        %v1937 = vunpack.c.l.b16 %v1922
        %v1938 = vunpack.c.l.b16 %v1923
        %v1939 = vpack.c.b16 %v1936, %v1935
        %v1940 = vpack.c.b16 %v1938, %v1937
        %v1944 = vsel %vm1170, %v1919, 0
        %1946 = vmatprep.subr.bf16.mxu0 0
        %1947 = vmatpush1.bf16.msra.mxu0 %v1939
        %1948 = vmatprep.subr.bf16.mxu0 0
        %1949 = vmatpush1.bf16.msra.mxu0 %v1940
        %1950 = vmatprep.subr.bf16.mxu0 0
        %1951 = vmatpush1.bf16.msra.mxu0 0
        %1952 = vmatprep.subr.bf16.mxu0 0
        %1953 = vmatpush1.bf16.msra.mxu0 0
        %1954 = vmatprep.subr.bf16.mxu0 0
        %1955 = vmatpush1.bf16.msra.mxu0 0
        %1956 = vmatprep.subr.bf16.mxu0 0
        %1957 = vmatpush1.bf16.msra.mxu0 0
        %1958 = vmatprep.subr.bf16.mxu0 0
        %1959 = vmatpush1.bf16.msra.mxu0 0
        %1960 = vmatprep.subr.bf16.mxu0 0
        %1961 = vmatpush1.bf16.msra.mxu0 0
        %1962 = vmatprep.subr.bf16.mxu0 0
        %1963 = vmatpush1.bf16.msra.mxu0 0
        %1964 = vmatprep.subr.bf16.mxu0 0
        %1965 = vmatpush1.bf16.msra.mxu0 0
        %1966 = vmatprep.subr.bf16.mxu0 0
        %1967 = vmatpush1.bf16.msra.mxu0 0
        %1968 = vmatprep.subr.bf16.mxu0 0
        %1969 = vmatpush1.bf16.msra.mxu0 0
        %1970 = vmatprep.subr.bf16.mxu0 0
        %1971 = vmatpush1.bf16.msra.mxu0 0
        %1972 = vmatprep.subr.bf16.mxu0 0
        %1973 = vmatpush1.bf16.msra.mxu0 0
        %1974 = vmatprep.subr.bf16.mxu0 0
        %1975 = vmatpush1.bf16.msra.mxu0 0
        %1976 = vmatprep.subr.bf16.mxu0 0
        %1977 = vmatpush1.bf16.msra.mxu0 0
        %1978 = vmatprep.mubr.bf16.mxu0 0
        %1979 = vmatmul.mubr.bf16.gmra.mrb[0].mxu0 %v1944
        %v1980 = vpop.f32.mrb[0].mxu0
        %v1981 = vadd.f32 %v1929, %v1980
        %v1982 = vpop.f32.mrb[0].mxu0
        %v1983 = vpop.f32.mrb[0].mxu0
        %v1984 = vadd.f32 %v1929, %v1983
        %v1985 = vpop.f32.mrb[0].mxu0
        %1986 = vdwg.mxu0
        %v1987 = vmax.f32 %v1981, 0.0
        %v1988 = vmax.f32 %v1984, 0.0
        %v1989 = vpack.c.bf16 %v1988, %v1987
        %v1990 = vld [vmem:[#allocation27] sm:$0xf]
        %v1991 = vld [vmem:[#allocation27 + $0x4] sm:$0xf]
        %v1992 = vld [vmem:[#allocation27 + $0x8] sm:$0xf]
        %v1993 = vld [vmem:[#allocation27 + $0xc] sm:$0xf]
        %v1994 = vld [vmem:[#allocation27 + $0x10] sm:$0xf]
        %v1995 = vld [vmem:[#allocation27 + $0x14] sm:$0xf]
        %v1996 = vld [vmem:[#allocation27 + $0x18] sm:$0xf]
        %v1997 = vld [vmem:[#allocation27 + $0x1c] sm:$0xf]
        %v1998 = vld [vmem:[#allocation28] sm:$0x1]
        %v2000 = vlaneseq
        %v2001 = vshrl.u32 %v2000, 7
        %v2002 = vsub.s32 0, %v2001
        %v2003 = vrot.slane %v1998, %v2002
        %v2013 = vunpack.c.l.b16 %v1990
        %v2014 = vunpack.c.l.b16 %v1991
        %v2015 = vunpack.c.l.b16 %v1992
        %v2016 = vunpack.c.l.b16 %v1993
        %v2017 = vunpack.c.l.b16 %v1994
        %v2018 = vunpack.c.l.b16 %v1995
        %v2019 = vunpack.c.l.b16 %v1996
        %v2020 = vunpack.c.l.b16 %v1997
        %v2021 = vpack.c.b16 %v2014, %v2013
        %v2022 = vpack.c.b16 %v2016, %v2015
        %v2023 = vpack.c.b16 %v2018, %v2017
        %v2024 = vpack.c.b16 %v2020, %v2019
        %v2030 = vsel %vm1827, %v1989, 0
        %2032 = vmatprep.subr.bf16.mxu0 0
        %2033 = vmatpush1.bf16.msra.mxu0 %v2021
        %2034 = vmatprep.subr.bf16.mxu0 0
        %2035 = vmatpush1.bf16.msra.mxu0 %v2022
        %2036 = vmatprep.subr.bf16.mxu0 0
        %2037 = vmatpush1.bf16.msra.mxu0 %v2023
        %2038 = vmatprep.subr.bf16.mxu0 0
        %2039 = vmatpush1.bf16.msra.mxu0 %v2024
        %2040 = vmatprep.subr.bf16.mxu0 0
        %2041 = vmatpush1.bf16.msra.mxu0 0
        %2042 = vmatprep.subr.bf16.mxu0 0
        %2043 = vmatpush1.bf16.msra.mxu0 0
        %2044 = vmatprep.subr.bf16.mxu0 0
        %2045 = vmatpush1.bf16.msra.mxu0 0
        %2046 = vmatprep.subr.bf16.mxu0 0
        %2047 = vmatpush1.bf16.msra.mxu0 0
        %2048 = vmatprep.subr.bf16.mxu0 0
        %2049 = vmatpush1.bf16.msra.mxu0 0
        %2050 = vmatprep.subr.bf16.mxu0 0
        %2051 = vmatpush1.bf16.msra.mxu0 0
        %2052 = vmatprep.subr.bf16.mxu0 0
        %2053 = vmatpush1.bf16.msra.mxu0 0
        %2054 = vmatprep.subr.bf16.mxu0 0
        %2055 = vmatpush1.bf16.msra.mxu0 0
        %2056 = vmatprep.subr.bf16.mxu0 0
        %2057 = vmatpush1.bf16.msra.mxu0 0
        %2058 = vmatprep.subr.bf16.mxu0 0
        %2059 = vmatpush1.bf16.msra.mxu0 0
        %2060 = vmatprep.subr.bf16.mxu0 0
        %2061 = vmatpush1.bf16.msra.mxu0 0
        %2062 = vmatprep.subr.bf16.mxu0 0
        %2063 = vmatpush1.bf16.msra.mxu0 0
        %2064 = vmatprep.mubr.bf16.mxu0 0
        %2065 = vmatmul.mubr.bf16.gmra.mrb[0].mxu0 %v2030
        %v2066 = vpop.f32.mrb[0].mxu0
        %v2067 = vadd.f32 %v2003, %v2066
        %v2068 = vpop.f32.mrb[0].mxu0
        %v2069 = vpop.f32.mrb[0].mxu0
        %v2070 = vadd.f32 %v2003, %v2069
        %v2071 = vpop.f32.mrb[0].mxu0
        %2072 = vdwg.mxu0
        %v2073 = vadd.f32 %v2067, %v1917
        %v2074 = vadd.f32 %v2070, %v1918
        %v2075 = vld [vmem:[#allocation30] sm:$0x1]
        %v2076 = vld [vmem:[#allocation31] sm:$0x1]
        %v2077 = vsel %vm1170, %v2073, 0.0
        %2078 = vadd.xlane.f32.xlu0 %v2077
        %v2079 = vpop.xlane.xlu0 %2078
        %v2080 = vsel %vm1170, %v2074, 0.0
        %2081 = vadd.xlane.f32.xlu0 %v2080
        %v2082 = vpop.xlane.xlu0 %2081
        %v2083 = vmul.f32 %v2079, %v1882
        %v2084 = vmul.f32 %v2082, %v1882
        %v2085 = vsub.f32 %v2073, %v2083
        %v2086 = vsub.f32 %v2074, %v2084
        %v2087 = vmul.f32 %v2085, %v2085
        %v2088 = vmul.f32 %v2086, %v2086
        %v2089 = vsel %vm1170, %v2087, 0.0
        %2090 = vadd.xlane.f32.xlu0 %v2089
        %v2091 = vpop.xlane.xlu0 %2090
        %v2092 = vsel %vm1170, %v2088, 0.0
        %2093 = vadd.xlane.f32.xlu0 %v2092
        %v2094 = vpop.xlane.xlu0 %2093
        %v2095 = vmul.f32 %v2091, %v1882
        %v2096 = vmul.f32 %v2094, %v1882
        %v2097 = vadd.f32 %v2095, 1e-05
        %v2098 = vadd.f32 %v2096, 1e-05
        %v2099 = vrsqrt.pop %v2097
        %v2100 = vrsqrt.pop %v2098
        %v2101 = vmul.f32 %v2085, %v2099
        %v2102 = vmul.f32 %v2086, %v2100
        %v2104 = vlaneseq
        %v2105 = vshrl.u32 %v2104, 7
        %v2106 = vsub.s32 0, %v2105
        %v2107 = vrot.slane %v2075, %v2106
        %v2109 = vmul.f32 %v2101, %v2107
        %v2110 = vmul.f32 %v2102, %v2107
        %v2112 = vlaneseq
        %v2113 = vshrl.u32 %v2112, 7
        %v2114 = vsub.s32 0, %v2113
        %v2115 = vrot.slane %v2076, %v2114
        %v2117 = vadd.f32 %v2109, %v2115
        %v2118 = vadd.f32 %v2110, %v2115
        %2119 = vst.msk [vmem:[%s896] sm:$0xff] %vm1170, %v2117
        %2120 = vst.msk [vmem:[%s896 + $0x8] sm:$0xff] %vm1170, %v2118
        %s2121 = sand.u32 %s463, 1
        %s2122 = scalar_lea.sflag [#allocation6], %s2121
        %s2123 = sand.u32 %s463, 1
        %s2124 = smul.addr %s2123, 16
        %s2125 = scalar_lea.vmem [#allocation33], %s2124
        %s2126 = sand.u32 %s491, 1
        %s2127 = scalar_lea.sflag [#allocation35], %s2126
        %s2128 = sand.u32 %s491, 1
        %s2129 = smul.addr %s2128, 32
        %s2130 = scalar_lea.vmem [#allocation34], %s2129
        // Predicated region
        $region169: #{tpu_custom_call.1} parent=91 // pred_check
          %p2131 = pneg %p473
        $region170: #{tpu_custom_call.1} parent=91 // pred_check_branch
          %2133 = sbr.rel (%p2131) target = $region172
        $region171: #{tpu_custom_call.1} parent=91 // pred_region
          %s2134 = smul.u32 2, %s56
          %s2136 = ssub.s32 256, 256
          %2137 = vsyncadd %s2122, %s2136
          %s2138 = smul.addr %s55, 4
          %s2139 = sadd.s32 %s2134, %s2138
          %s2140 = smul.addr %s2139, 128
          %s2141 = scalar_lea.hbm %s18, %s2140
          %s2142 = sshll.u32 %s2125, 4
          %s2143 = int_to_ptr.vmem [resolvable:$true] %s2142
          %2148 = dma.vmem_to_hbm [thread:$0]  %s2143, 256, %s2141, %s2122, 128, 128, 8
        $region172: #{tpu_custom_call.1} parent=91 // pred_fallthru
          _
        // Predicated region
        $region173: #{tpu_custom_call.1} parent=91 // pred_check
          %p2149 = pneg %p501
        $region174: #{tpu_custom_call.1} parent=91 // pred_check_branch
          %2151 = sbr.rel (%p2149) target = $region176
        $region175: #{tpu_custom_call.1} parent=91 // pred_region
          #allocation37 [shape = 'u32[6]{0}', space=smem, size = 0x18, scoped, tag = 'DMA stride descriptor']
          %s2152 = smul.u32 2, %s56
          %s2154 = ssub.s32 512, 512
          %2155 = vsyncadd %s2127, %s2154
          %s2156 = smul.addr %s55, 16
          %s2157 = sadd.s32 %s2152, %s2156
          %s2158 = smul.addr %s2157, 64
          %s2159 = scalar_lea.hbm %s19, %s2158
          %s2161 = sshll.u32 1, 14
          %s2162 = sxor.u32 4294967295, %s2161
          %s2165 = sshll.u32 7, 18
          %s2166 = sxor.u32 4294967295, %s2165
          %s2167 = sand.u32 0, %s2166
          %s2169 = sor.u32 %s2167, 0
          %s2171 = sshll.u32 3, 24
          %s2172 = sxor.u32 4294967295, %s2171
          %s2173 = sand.u32 %s2169, %s2172
          %s2175 = sor.u32 %s2173, 0
          %s2176 = sshll.u32 %s2130, 4
          %s2177 = int_to_ptr.vmem [resolvable:$true] %s2176
          %2183 = sst [smem:[#allocation37]] 128
          %s2184 = scalar_lea.smem [#allocation37], 1
          %2185 = sst [smem:[%s2184]] 256
          %s2186 = scalar_lea.smem [#allocation37], 2
          %2187 = sst [smem:[%s2186]] 2
          %s2188 = scalar_lea.smem [#allocation37], 3
          %2189 = sst [smem:[%s2188]] 64
          %s2190 = scalar_lea.smem [#allocation37], 4
          %2191 = sst [smem:[%s2190]] 64
          %s2192 = scalar_lea.smem [#allocation37], 5
          %2193 = sst [smem:[%s2192]] 4
          %2195 = dma.general %s2177, 512, %s2159, %s2127, [#allocation36], [#allocation37], %s2175, 0
        $region176: #{tpu_custom_call.1} parent=91 // pred_fallthru
          _
      $region92: #{tpu_custom_call.1} parent=5 // pred_fallthru
        _
      %p2196 = scmp.le.s32.totalorder 2, %s46
      // Predicated region
      $region177: #{tpu_custom_call.1} parent=5 // pred_check
        %p2197 = pneg %p2196
      $region178: #{tpu_custom_call.1} parent=5 // pred_check_branch
        %2199 = sbr.rel (%p2197) target = $region180
      $region179: #{tpu_custom_call.1} parent=5 // pred_region
        %s2200 = ssub.s32 %s46, 2
        // Predicated region
        $region181: #{tpu_custom_call.1} parent=179 // pred_check
          %p2201 = pneg %p479
        $region182: #{tpu_custom_call.1} parent=179 // pred_check_branch
          %2203 = sbr.rel (%p2201) target = $region184
        $region183: #{tpu_custom_call.1} parent=179 // pred_region
          %s2204 = sand.u32 %s464, 1
          %s2205 = scalar_lea.sflag [#allocation6], %s2204
          %s2206 = sand.u32 %s464, 1
          %s2207 = smul.addr %s2206, 16
          %s2208 = scalar_lea.vmem [#allocation33], %s2207
          %2209 = dma.done %s2205, 256
        $region184: #{tpu_custom_call.1} parent=179 // pred_fallthru
          _
        // Predicated region
        $region185: #{tpu_custom_call.1} parent=179 // pred_check
          %p2210 = pneg %p507
        $region186: #{tpu_custom_call.1} parent=179 // pred_check_branch
          %2212 = sbr.rel (%p2210) target = $region188
        $region187: #{tpu_custom_call.1} parent=179 // pred_region
          %s2213 = sand.u32 %s492, 1
          %s2214 = scalar_lea.sflag [#allocation35], %s2213
          %s2215 = sand.u32 %s492, 1
          %s2216 = smul.addr %s2215, 32
          %s2217 = scalar_lea.vmem [#allocation34], %s2216
          %2218 = dma.done %s2214, 512
        $region188: #{tpu_custom_call.1} parent=179 // pred_fallthru
          _
      $region180: #{tpu_custom_call.1} parent=5 // pred_fallthru
        _
    $region6: #{tpu_custom_call.1} parent=1 // loop_footer
      %s50 = sadd.s32 1, %s46
    $region7: #{tpu_custom_call.1} parent=1 // loop_footer_branch
      %45 = sbr.rel target = $region3
    $region8: #{tpu_custom_call.1} parent=1 // loop_exit
      _
    %2219 = vsyncpa [#allocation5], 1
    %s2220 = scalar_lea.sflag [#allocation5], 1
    %2221 = vsyncpa %s2220, 1
    %2222 = vsyncpa [#allocation8], 1
    %s2223 = scalar_lea.sflag [#allocation8], 1
    %2224 = vsyncpa %s2223, 1
    %2225 = vsyncpa [#allocation11], 1
    %2226 = vsyncpa [#allocation14], 1
    %2227 = vsyncpa [#allocation17], 1
    %2228 = vsyncpa [#allocation20], 1
    %2229 = vsyncpa [#allocation23], 1
    %2230 = vsyncpa [#allocation26], 1
    %2231 = vsyncpa [#allocation29], 1
    %2232 = vsyncpa [#allocation32], 1
    %2233 = vsyncpa [#allocation6], 1
    %s2234 = scalar_lea.sflag [#allocation6], 1
    %2235 = vsyncpa %s2234, 1
    %2236 = vsyncpa [#allocation35], 1
    %s2237 = scalar_lea.sflag [#allocation35], 1
    %2238 = vsyncpa %s2237, 1

</llo_original>
